<compile_context>
chip_gen: v7x
topology: tpu7x:2x2x1
jax: 0.10.0
libtpu: 0.0.40
codegen_flags: <defaults>
</compile_context>

<pallas_src>
import functools

import jax
import jax.numpy as jnp
from jax.experimental import pallas as pl
from jax.experimental.pallas import tpu as pltpu


# ---------------------------------------------------------------------------
# Fused Linear (+ optional ReLU) kernel.  Grid = (Mp//tm, Np//tn); each step
# does one full-K matmul for a (tm, tn) output tile, then bias (+ReLU).
# ---------------------------------------------------------------------------
def _linear_kernel(x_ref, w_ref, b_ref, o_ref, *, apply_relu):
    out = jnp.dot(x_ref[...], w_ref[...], preferred_element_type=jnp.float32)
    out = out + b_ref[...]  # (1, tn) f32 bias broadcasts over rows
    if apply_relu:
        out = jnp.maximum(out, 0.0)
    o_ref[...] = out.astype(o_ref.dtype)


def _round_up(n, m):
    return ((n + m - 1) // m) * m


# Tiling constants (see header for rationale).
_TM_CAP = 512    # VMEM-safe on v7x (64 MiB): resident x = tm*K*2B <= 8 MiB at K=8192
_TN_PREF = 512   # 16 even N-tiles at D=8192 -> balanced across v7x's 2 TensorCores
_M_ALIGN = 16    # bf16 sublane packing


def _choose_n_tile(N):
    """Pad N to a lane-dense multiple of 128; tile at most _TN_PREF wide."""
    if N <= 128:
        return 128, 128
    if N <= _TN_PREF:
        np_ = _round_up(N, 128)
        return np_, np_
    return _round_up(N, _TN_PREF), _TN_PREF


def prepare_layer(w, b):
    """One-time weight prep (outside the jit'd forward): cast to bf16, pad the
    output dim to a lane-dense multiple of 128, pre-reshape bias to (1, Np) f32.
    K is never padded: full-K blocks are legal for any K."""
    K, N = w.shape
    Np, tn = _choose_n_tile(N)
    wp = jnp.zeros((K, Np), jnp.bfloat16).at[:, :N].set(w.astype(jnp.bfloat16))
    bp = jnp.zeros((1, Np), jnp.float32).at[0, :N].set(b.astype(jnp.float32))
    meta = dict(K=K, N=N, Np=Np, tn=tn)
    return wp, bp, meta


def linear_pallas(x, wp, bp, meta, *, apply_relu, out_dtype):
    """x: (Mp, K) bf16, wp: (K, Np) bf16, bp: (1, Np) f32 -> (Mp, Np)."""
    Mp, K = x.shape
    assert K == meta["K"], (K, meta["K"])
    Np, tn = meta["Np"], meta["tn"]

    tm = Mp if Mp <= _TM_CAP else _TM_CAP
    assert Mp % tm == 0 and Np % tn == 0

    # Explicit VMEM budget: double-buffered x / w / out blocks + bias + slack.
    out_bytes = jnp.dtype(out_dtype).itemsize
    vmem_limit = int(
        2 * (tm * K * 2 + K * tn * 2 + tm * tn * out_bytes + tn * 4) + (2 << 20)
    )

    kernel = functools.partial(_linear_kernel, apply_relu=apply_relu)

    return pl.pallas_call(
        kernel,
        out_shape=jax.ShapeDtypeStruct((Mp, Np), out_dtype),
        grid_spec=pltpu.PrefetchScalarGridSpec(
            num_scalar_prefetch=0,
            # N is the fast axis: the x block index (i, 0) is constant across it,
            # so the activation is DMA'd once per M-tile.
            grid=(Mp // tm, Np // tn),
            in_specs=[
                pl.BlockSpec((tm, K), lambda i, j: (i, 0)),   # full-K resident x
                pl.BlockSpec((K, tn), lambda i, j: (0, j)),   # full-K weight panel
                pl.BlockSpec((1, tn), lambda i, j: (0, j)),   # bias (f32)
            ],
            out_specs=pl.BlockSpec((tm, tn), lambda i, j: (i, j)),
        ),
        compiler_params=pltpu.CompilerParams(
            dimension_semantics=("parallel", "parallel"),
            vmem_limit_bytes=vmem_limit,
        ),
    )(x, wp, bp)


# ---------------------------------------------------------------------------
# myModel: Linear(in, D) -> ReLU -> Linear(D, D) -> ReLU -> Linear(D, D)
#          -> ReLU -> Linear(D, 1)
# ---------------------------------------------------------------------------
def init_params(key, input_dims, dims):
    """Deterministic init mimicking PyTorch nn.Linear default U(-1/sqrt(fan_in), ..)."""
    layer_shapes = [(input_dims, dims), (dims, dims), (dims, dims), (dims, 1)]
    params = []
    for in_f, out_f in layer_shapes:
        key, kw, kb = jax.random.split(key, 3)
        bound = 1.0 / (in_f ** 0.5)
        w = jax.random.uniform(kw, (in_f, out_f), jnp.float32, -bound, bound)
        b = jax.random.uniform(kb, (out_f,), jnp.float32, -bound, bound)
        params.append((w, b))
    return params


def make_forward(metas):
    n_layers = len(metas)

    @jax.jit
    def forward(x, weights, biases):
        M = x.shape[0]
        if M <= _TM_CAP:
            Mp = _round_up(M, _M_ALIGN)      # pad only to bf16 sublane pack
        else:
            Mp = _round_up(M, _TM_CAP)       # tm = _TM_CAP tiles

        h = x.astype(jnp.bfloat16)
        if Mp != M:
            h = jnp.pad(h, ((0, Mp - M), (0, 0)))

        for idx in range(n_layers):
            meta = metas[idx]
            last = idx == n_layers - 1
            # Drop padded output columns from the previous layer (exact zeros:
            # zero weight cols + zero bias, ReLU(0)=0).
            if h.shape[1] != meta["K"]:
                assert h.shape[1] > meta["K"]
                h = h[:, : meta["K"]]
            h = linear_pallas(
                h, weights[idx], biases[idx], meta,
                apply_relu=not last,
                out_dtype=jnp.float32 if last else jnp.bfloat16,
            )

        out = h
        if out.shape[0] != M or out.shape[1] != metas[-1]["N"]:
            out = out[:M, : metas[-1]["N"]]
        return out

    return forward


def reference_forward(x, params):
    """Pure-JAX reference mirroring the kernel's bf16-in / f32-accumulate path."""
    h = x.astype(jnp.bfloat16)
    n = len(params)
    for idx, (w, b) in enumerate(params):
        y = jnp.dot(h, w.astype(jnp.bfloat16),
                    preferred_element_type=jnp.float32) + b.astype(jnp.float32)
        if idx < n - 1:
            h = jnp.maximum(y, 0.0).astype(jnp.bfloat16)
        else:
            h = y
    return h


if __name__ == "__main__":
    # Small shapes consistent with the module: x of shape (batch, 3), hidden
    # dims shrunk 8192 -> 256 for a fast synthetic test (architecture unchanged).
    batch = 256
    input_dims = 3
    hidden_dims = 256

    key = jax.random.PRNGKey(0)
    key, kx = jax.random.split(key)
    x = jax.random.uniform(kx, (batch, input_dims), jnp.float32)

    params = init_params(key, input_dims, hidden_dims)

    # One-time weight prep: bf16 cast + N padding, outside the jit'd forward.
    prepped = [prepare_layer(w, b) for (w, b) in params]
    weights = [p[0] for p in prepped]
    biases = [p[1] for p in prepped]
    metas = [p[2] for p in prepped]

    forward = make_forward(metas)

    out = jax.block_until_ready(forward(x, weights, biases))
    assert out.shape == (batch, 1), out.shape

    ref = reference_forward(x, params)
    assert jnp.allclose(out, ref, atol=5e-2, rtol=5e-2), (
        "mismatch vs reference, max abs err = %f"
        % float(jnp.max(jnp.abs(out - ref)))
    )

    print("KERNEL_OK")
</pallas_src>

<mosaic_0001>
module attributes {stable_mosaic.version = 11 : i64} {
  func.func @_linear_kernel(%arg0: i32, %arg1: i32, %arg2: memref<256x3xbf16, #tpu.memory_space<vmem>>, %arg3: memref<3x256xbf16, #tpu.memory_space<vmem>>, %arg4: memref<1x256xf32, #tpu.memory_space<vmem>>, %arg5: memref<256x256xbf16, #tpu.memory_space<vmem>>) attributes {dimension_semantics = [#tpu.dimension_semantics<parallel>, #tpu.dimension_semantics<parallel>], iteration_bounds = array<i64: 1, 1>, scalar_prefetch = 0 : i64, scratch_operands = 0 : i64, tpu.core_type = #tpu.core_type<tc>, window_params = [{transform_indices = @transform_0, window_bounds = array<i64: 256, 3>}, {transform_indices = @transform_1, window_bounds = array<i64: 3, 256>}, {transform_indices = @transform_2, window_bounds = array<i64: 1, 256>}, {transform_indices = @transform_3, window_bounds = array<i64: 256, 256>}]} {
    %c0 = arith.constant 0 : index
    %c0_0 = arith.constant 0 : index
    %0 = vector.load %arg2[%c0, %c0_0] : memref<256x3xbf16, #tpu.memory_space<vmem>>, vector<256x3xbf16>
    %c0_1 = arith.constant 0 : index
    %c0_2 = arith.constant 0 : index
    %1 = vector.load %arg3[%c0_1, %c0_2] : memref<3x256xbf16, #tpu.memory_space<vmem>>, vector<3x256xbf16>
    %cst = arith.constant dense<0.000000e+00> : vector<256x256xf32>
    %2 = tpu.matmul %0, %1, %cst {dimension_numbers = #tpu.dot_dimension_numbers<[1], [0], [0], [1], [0, 0, 1, 1], [], []>} : vector<256x3xbf16>, vector<3x256xbf16>, vector<256x256xf32> -> vector<256x256xf32>
    %c0_3 = arith.constant 0 : index
    %c0_4 = arith.constant 0 : index
    %3 = vector.load %arg4[%c0_3, %c0_4] : memref<1x256xf32, #tpu.memory_space<vmem>>, vector<1x256xf32>
    %4 = vector.broadcast %3 : vector<1x256xf32> to vector<256x256xf32>
    %5 = arith.addf %2, %4 : vector<256x256xf32>
    %cst_5 = arith.constant 0.000000e+00 : f32
    %6 = vector.broadcast %cst_5 : f32 to vector<256x256xf32>
    %7 = arith.maximumf %5, %6 : vector<256x256xf32>
    %8 = arith.truncf %7 : vector<256x256xf32> to vector<256x256xbf16>
    %c0_6 = arith.constant 0 : index
    %c0_7 = arith.constant 0 : index
    %9 = vector.load %arg5[%c0_6, %c0_7] : memref<256x256xbf16, #tpu.memory_space<vmem>>, vector<256x256xbf16>
    tpu.vector_store %arg5[%c0_6, %c0_7], %8 {strides = array<i32>} : memref<256x256xbf16, #tpu.memory_space<vmem>>, vector<256x256xbf16>,
    return
  }
  func.func @transform_0(%arg0: i32, %arg1: i32) -> (i32, i32) {
    %c0_i32 = arith.constant 0 : i32
    %c0_i32_0 = arith.constant 0 : i32
    return %arg0, %c0_i32 : i32, i32
  }
  func.func @transform_1(%arg0: i32, %arg1: i32) -> (i32, i32) {
    %c0_i32 = arith.constant 0 : i32
    %c0_i32_0 = arith.constant 0 : i32
    return %c0_i32, %arg1 : i32, i32
  }
  func.func @transform_2(%arg0: i32, %arg1: i32) -> (i32, i32) {
    %c0_i32 = arith.constant 0 : i32
    %c0_i32_0 = arith.constant 0 : i32
    return %c0_i32, %arg1 : i32, i32
  }
  func.func @transform_3(%arg0: i32, %arg1: i32) -> (i32, i32) {
    %c0_i32 = arith.constant 0 : i32
    return %arg0, %arg1 : i32, i32
  }
}

module attributes {stable_mosaic.version = 11 : i64} {
  func.func @_linear_kernel(%arg0: i32, %arg1: i32, %arg2: memref<256x256xbf16, #tpu.memory_space<vmem>>, %arg3: memref<256x256xbf16, #tpu.memory_space<vmem>>, %arg4: memref<1x256xf32, #tpu.memory_space<vmem>>, %arg5: memref<256x256xbf16, #tpu.memory_space<vmem>>) attributes {dimension_semantics = [#tpu.dimension_semantics<parallel>, #tpu.dimension_semantics<parallel>], iteration_bounds = array<i64: 1, 1>, scalar_prefetch = 0 : i64, scratch_operands = 0 : i64, tpu.core_type = #tpu.core_type<tc>, window_params = [{transform_indices = @transform_0, window_bounds = array<i64: 256, 256>}, {transform_indices = @transform_1, window_bounds = array<i64: 256, 256>}, {transform_indices = @transform_2, window_bounds = array<i64: 1, 256>}, {transform_indices = @transform_3, window_bounds = array<i64: 256, 256>}]} {
    %c0 = arith.constant 0 : index
    %c0_0 = arith.constant 0 : index
    %0 = vector.load %arg2[%c0, %c0_0] : memref<256x256xbf16, #tpu.memory_space<vmem>>, vector<256x256xbf16>
    %c0_1 = arith.constant 0 : index
    %c0_2 = arith.constant 0 : index
    %1 = vector.load %arg3[%c0_1, %c0_2] : memref<256x256xbf16, #tpu.memory_space<vmem>>, vector<256x256xbf16>
    %cst = arith.constant dense<0.000000e+00> : vector<256x256xf32>
    %2 = tpu.matmul %0, %1, %cst {dimension_numbers = #tpu.dot_dimension_numbers<[1], [0], [0], [1], [0, 0, 1, 1], [], []>} : vector<256x256xbf16>, vector<256x256xbf16>, vector<256x256xf32> -> vector<256x256xf32>
    %c0_3 = arith.constant 0 : index
    %c0_4 = arith.constant 0 : index
    %3 = vector.load %arg4[%c0_3, %c0_4] : memref<1x256xf32, #tpu.memory_space<vmem>>, vector<1x256xf32>
    %4 = vector.broadcast %3 : vector<1x256xf32> to vector<256x256xf32>
    %5 = arith.addf %2, %4 : vector<256x256xf32>
    %cst_5 = arith.constant 0.000000e+00 : f32
    %6 = vector.broadcast %cst_5 : f32 to vector<256x256xf32>
    %7 = arith.maximumf %5, %6 : vector<256x256xf32>
    %8 = arith.truncf %7 : vector<256x256xf32> to vector<256x256xbf16>
    %c0_6 = arith.constant 0 : index
    %c0_7 = arith.constant 0 : index
    %9 = vector.load %arg5[%c0_6, %c0_7] : memref<256x256xbf16, #tpu.memory_space<vmem>>, vector<256x256xbf16>
    tpu.vector_store %arg5[%c0_6, %c0_7], %8 {strides = array<i32>} : memref<256x256xbf16, #tpu.memory_space<vmem>>, vector<256x256xbf16>,
    return
  }
  func.func @transform_0(%arg0: i32, %arg1: i32) -> (i32, i32) {
    %c0_i32 = arith.constant 0 : i32
    %c0_i32_0 = arith.constant 0 : i32
    return %arg0, %c0_i32 : i32, i32
  }
  func.func @transform_1(%arg0: i32, %arg1: i32) -> (i32, i32) {
    %c0_i32 = arith.constant 0 : i32
    %c0_i32_0 = arith.constant 0 : i32
    return %c0_i32, %arg1 : i32, i32
  }
  func.func @transform_2(%arg0: i32, %arg1: i32) -> (i32, i32) {
    %c0_i32 = arith.constant 0 : i32
    %c0_i32_0 = arith.constant 0 : i32
    return %c0_i32, %arg1 : i32, i32
  }
  func.func @transform_3(%arg0: i32, %arg1: i32) -> (i32, i32) {
    %c0_i32 = arith.constant 0 : i32
    return %arg0, %arg1 : i32, i32
  }
}

module attributes {stable_mosaic.version = 11 : i64} {
  func.func @_linear_kernel(%arg0: i32, %arg1: i32, %arg2: memref<256x256xbf16, #tpu.memory_space<vmem>>, %arg3: memref<256x128xbf16, #tpu.memory_space<vmem>>, %arg4: memref<1x128xf32, #tpu.memory_space<vmem>>, %arg5: memref<256x128xf32, #tpu.memory_space<vmem>>) attributes {dimension_semantics = [#tpu.dimension_semantics<parallel>, #tpu.dimension_semantics<parallel>], iteration_bounds = array<i64: 1, 1>, scalar_prefetch = 0 : i64, scratch_operands = 0 : i64, tpu.core_type = #tpu.core_type<tc>, window_params = [{transform_indices = @transform_0, window_bounds = array<i64: 256, 256>}, {transform_indices = @transform_1, window_bounds = array<i64: 256, 128>}, {transform_indices = @transform_2, window_bounds = array<i64: 1, 128>}, {transform_indices = @transform_3, window_bounds = array<i64: 256, 128>}]} {
    %c0 = arith.constant 0 : index
    %c0_0 = arith.constant 0 : index
    %0 = vector.load %arg2[%c0, %c0_0] : memref<256x256xbf16, #tpu.memory_space<vmem>>, vector<256x256xbf16>
    %c0_1 = arith.constant 0 : index
    %c0_2 = arith.constant 0 : index
    %1 = vector.load %arg3[%c0_1, %c0_2] : memref<256x128xbf16, #tpu.memory_space<vmem>>, vector<256x128xbf16>
    %cst = arith.constant dense<0.000000e+00> : vector<256x128xf32>
    %2 = tpu.matmul %0, %1, %cst {dimension_numbers = #tpu.dot_dimension_numbers<[1], [0], [0], [1], [0, 0, 1, 1], [], []>} : vector<256x256xbf16>, vector<256x128xbf16>, vector<256x128xf32> -> vector<256x128xf32>
    %c0_3 = arith.constant 0 : index
    %c0_4 = arith.constant 0 : index
    %3 = vector.load %arg4[%c0_3, %c0_4] : memref<1x128xf32, #tpu.memory_space<vmem>>, vector<1x128xf32>
    %4 = vector.broadcast %3 : vector<1x128xf32> to vector<256x128xf32>
    %5 = arith.addf %2, %4 : vector<256x128xf32>
    %c0_5 = arith.constant 0 : index
    %c0_6 = arith.constant 0 : index
    %6 = vector.load %arg5[%c0_5, %c0_6] : memref<256x128xf32, #tpu.memory_space<vmem>>, vector<256x128xf32>
    tpu.vector_store %arg5[%c0_5, %c0_6], %5 {strides = array<i32>} : memref<256x128xf32, #tpu.memory_space<vmem>>, vector<256x128xf32>,
    return
  }
  func.func @transform_0(%arg0: i32, %arg1: i32) -> (i32, i32) {
    %c0_i32 = arith.constant 0 : i32
    %c0_i32_0 = arith.constant 0 : i32
    return %arg0, %c0_i32 : i32, i32
  }
  func.func @transform_1(%arg0: i32, %arg1: i32) -> (i32, i32) {
    %c0_i32 = arith.constant 0 : i32
    %c0_i32_0 = arith.constant 0 : i32
    return %c0_i32, %arg1 : i32, i32
  }
  func.func @transform_2(%arg0: i32, %arg1: i32) -> (i32, i32) {
    %c0_i32 = arith.constant 0 : i32
    %c0_i32_0 = arith.constant 0 : i32
    return %c0_i32, %arg1 : i32, i32
  }
  func.func @transform_3(%arg0: i32, %arg1: i32) -> (i32, i32) {
    %c0_i32 = arith.constant 0 : i32
    return %arg0, %arg1 : i32, i32
  }
}

</mosaic_0001>

<llo_original>
// kernel: forward.4
$region0: #{forward.4}
  #allocation0 [shape = 'u32[]', space=smem, size = 0x4, offset = 0x4, fixed_abs, tag = 'smem constant byte address 0x4 - core index']
  #allocation1 [shape = 'u32[144,128]{1,0:T(1,128)}', space=vmem, size = 0x12000, scoped, tag = 'internal scratch']
  %s0 = inlined_call_operand.vmem [shape: bf16[256,3], index: 0, kind: input, shape index: {}]
  %s1 = inlined_call_operand.vmem [shape: bf16[3,256], index: 1, kind: input, shape index: {}]
  %s2 = inlined_call_operand.vmem [shape: f32[1,256], index: 2, kind: input, shape index: {}]
  %s3 = inlined_call_operand.vmem [shape: bf16[256,256], index: 3, kind: output, shape index: {}]
  %s4 = sld [smem:[#allocation0]]
  $region22: #{forward.4} parent=0
    _
  %s6 = ssub.s32 1, %s4
  %s7 = scalar_select 0, %s6, %s4
  // Predicated region
  $region2: #{forward.4} parent=0 // pred_check
    _
  $region3: #{forward.4} parent=0 // pred_check_branch
    %9 = sbr.rel (0) target = $region5
  $region4: #{forward.4} parent=0 // pred_region
    _
  $region5: #{forward.4} parent=0 // pred_fallthru
    _
  // Predicated region
  $region6: #{forward.4} parent=0 // pred_check
    _
  $region7: #{forward.4} parent=0 // pred_check_branch
    %11 = sbr.rel (0) target = $region9
  $region8: #{forward.4} parent=0 // pred_region
    _
  $region9: #{forward.4} parent=0 // pred_fallthru
    _
  // Predicated region
  $region10: #{forward.4} parent=0 // pred_check
    _
  $region11: #{forward.4} parent=0 // pred_check_branch
    %13 = sbr.rel (0) target = $region13
  $region12: #{forward.4} parent=0 // pred_region
    _
  $region13: #{forward.4} parent=0 // pred_fallthru
    _
  %v15 = vld [vmem:[%s0] sm:$0xf]
  %v16 = vld [vmem:[%s0 + $0x4] sm:$0xf]
  %v17 = vld [vmem:[%s0 + $0x8] sm:$0xf]
  %v18 = vld [vmem:[%s0 + $0xc] sm:$0xf]
  %v19 = vld [vmem:[%s0 + $0x10] sm:$0xf]
  %v20 = vld [vmem:[%s0 + $0x14] sm:$0xf]
  %v21 = vld [vmem:[%s0 + $0x18] sm:$0xf]
  %v22 = vld [vmem:[%s0 + $0x1c] sm:$0xf]
  %v23 = vld [vmem:[%s0 + $0x20] sm:$0xf]
  %v24 = vld [vmem:[%s0 + $0x24] sm:$0xf]
  %v25 = vld [vmem:[%s0 + $0x28] sm:$0xf]
  %v26 = vld [vmem:[%s0 + $0x2c] sm:$0xf]
  %v27 = vld [vmem:[%s0 + $0x30] sm:$0xf]
  %v28 = vld [vmem:[%s0 + $0x34] sm:$0xf]
  %v29 = vld [vmem:[%s0 + $0x38] sm:$0xf]
  %v30 = vld [vmem:[%s0 + $0x3c] sm:$0xf]
  %v31 = vld [vmem:[%s0 + $0x40] sm:$0xf]
  %v32 = vld [vmem:[%s0 + $0x44] sm:$0xf]
  %v33 = vld [vmem:[%s0 + $0x48] sm:$0xf]
  %v34 = vld [vmem:[%s0 + $0x4c] sm:$0xf]
  %v35 = vld [vmem:[%s0 + $0x50] sm:$0xf]
  %v36 = vld [vmem:[%s0 + $0x54] sm:$0xf]
  %v37 = vld [vmem:[%s0 + $0x58] sm:$0xf]
  %v38 = vld [vmem:[%s0 + $0x5c] sm:$0xf]
  %v39 = vld [vmem:[%s0 + $0x60] sm:$0xf]
  %v40 = vld [vmem:[%s0 + $0x64] sm:$0xf]
  %v41 = vld [vmem:[%s0 + $0x68] sm:$0xf]
  %v42 = vld [vmem:[%s0 + $0x6c] sm:$0xf]
  %v43 = vld [vmem:[%s0 + $0x70] sm:$0xf]
  %v44 = vld [vmem:[%s0 + $0x74] sm:$0xf]
  %v45 = vld [vmem:[%s0 + $0x78] sm:$0xf]
  %v46 = vld [vmem:[%s0 + $0x7c] sm:$0xf]
  %v47 = vld [vmem:[%s1] sm:$0xf]
  %v48 = vld [vmem:[%s2] sm:$0x3]
  %v50 = vlaneseq
  %v51 = vshrl.u32 %v50, 7
  %v52 = vsub.s32 0, %v51
  %v53 = vrot.slane %v48, %v52
  %v54 = vlaneseq
  %v55 = vshrl.u32 %v54, 7
  %v56 = vsub.s32 1, %v55
  %v57 = vrot.slane %v48, %v56
  %v92 = vunpack.c.l.b16 %v15
  %v93 = vunpack.c.l.b16 %v16
  %v94 = vunpack.c.l.b16 %v17
  %v95 = vunpack.c.l.b16 %v18
  %v96 = vunpack.c.l.b16 %v19
  %v97 = vunpack.c.l.b16 %v20
  %v98 = vunpack.c.l.b16 %v21
  %v99 = vunpack.c.l.b16 %v22
  %v100 = vunpack.c.l.b16 %v23
  %v101 = vunpack.c.l.b16 %v24
  %v102 = vunpack.c.l.b16 %v25
  %v103 = vunpack.c.l.b16 %v26
  %v104 = vunpack.c.l.b16 %v27
  %v105 = vunpack.c.l.b16 %v28
  %v106 = vunpack.c.l.b16 %v29
  %v107 = vunpack.c.l.b16 %v30
  %v108 = vunpack.c.l.b16 %v31
  %v109 = vunpack.c.l.b16 %v32
  %v110 = vunpack.c.l.b16 %v33
  %v111 = vunpack.c.l.b16 %v34
  %v112 = vunpack.c.l.b16 %v35
  %v113 = vunpack.c.l.b16 %v36
  %v114 = vunpack.c.l.b16 %v37
  %v115 = vunpack.c.l.b16 %v38
  %v116 = vunpack.c.l.b16 %v39
  %v117 = vunpack.c.l.b16 %v40
  %v118 = vunpack.c.l.b16 %v41
  %v119 = vunpack.c.l.b16 %v42
  %v120 = vunpack.c.l.b16 %v43
  %v121 = vunpack.c.l.b16 %v44
  %v122 = vunpack.c.l.b16 %v45
  %v123 = vunpack.c.l.b16 %v46
  %v124 = vpack.c.b16 %v93, %v92
  %v125 = vpack.c.b16 %v95, %v94
  %v126 = vpack.c.b16 %v97, %v96
  %v127 = vpack.c.b16 %v99, %v98
  %v128 = vpack.c.b16 %v101, %v100
  %v129 = vpack.c.b16 %v103, %v102
  %v130 = vpack.c.b16 %v105, %v104
  %v131 = vpack.c.b16 %v107, %v106
  %v132 = vpack.c.b16 %v109, %v108
  %v133 = vpack.c.b16 %v111, %v110
  %v134 = vpack.c.b16 %v113, %v112
  %v135 = vpack.c.b16 %v115, %v114
  %v136 = vpack.c.b16 %v117, %v116
  %v137 = vpack.c.b16 %v119, %v118
  %v138 = vpack.c.b16 %v121, %v120
  %v139 = vpack.c.b16 %v123, %v122
  %v142 = vunpack.c.l.s4 1983009808
  %v143 = vunpack.c.0.s8 %v142
  %v144 = vlaneseq
  %v145 = vshrl.u32 %v144, 7
  %v146 = vsub.s32 %v143, %v145
  %v147 = vrot.slane %v47, %v146
  %v148 = vcombine.high %v147, %v147
  %vm149 = vcmask 23552
  %v151 = vsel %vm149, %v124, 0
  %v154 = vsel %vm149, %v125, 0
  %v157 = vsel %vm149, %v126, 0
  %v160 = vsel %vm149, %v127, 0
  %v163 = vsel %vm149, %v128, 0
  %v166 = vsel %vm149, %v129, 0
  %v169 = vsel %vm149, %v130, 0
  %v172 = vsel %vm149, %v131, 0
  %v175 = vsel %vm149, %v132, 0
  %v178 = vsel %vm149, %v133, 0
  %v181 = vsel %vm149, %v134, 0
  %v184 = vsel %vm149, %v135, 0
  %v187 = vsel %vm149, %v136, 0
  %v190 = vsel %vm149, %v137, 0
  %v193 = vsel %vm149, %v138, 0
  %v196 = vsel %vm149, %v139, 0
  %vm198 = vcmask 1040384
  %vm199 = vcmask 1041408
  %v200 = vsel %vm198, 4294967295, 65535
  %v201 = vsel %vm199, %v200, 0
  %v203 = vand.u32 %v147, %v201
  %v206 = vand.u32 %v148, %v201
  %208 = vmatprep.subr.bf16.mxu0 %v206
  %209 = vmatpush1.bf16.msra.mxu0 %v203
  %210 = vmatprep.subr.bf16.mxu0 0
  %211 = vmatpush1.bf16.msra.mxu0 0
  %212 = vmatprep.subr.bf16.mxu0 0
  %213 = vmatpush1.bf16.msra.mxu0 0
  %214 = vmatprep.subr.bf16.mxu0 0
  %215 = vmatpush1.bf16.msra.mxu0 0
  %216 = vmatprep.subr.bf16.mxu0 0
  %217 = vmatpush1.bf16.msra.mxu0 0
  %218 = vmatprep.subr.bf16.mxu0 0
  %219 = vmatpush1.bf16.msra.mxu0 0
  %220 = vmatprep.subr.bf16.mxu0 0
  %221 = vmatpush1.bf16.msra.mxu0 0
  %222 = vmatprep.subr.bf16.mxu0 0
  %223 = vmatpush1.bf16.msra.mxu0 0
  %224 = vmatprep.subr.bf16.mxu0 0
  %225 = vmatpush1.bf16.msra.mxu0 0
  %226 = vmatprep.subr.bf16.mxu0 0
  %227 = vmatpush1.bf16.msra.mxu0 0
  %228 = vmatprep.subr.bf16.mxu0 0
  %229 = vmatpush1.bf16.msra.mxu0 0
  %230 = vmatprep.subr.bf16.mxu0 0
  %231 = vmatpush1.bf16.msra.mxu0 0
  %232 = vmatprep.subr.bf16.mxu0 0
  %233 = vmatpush1.bf16.msra.mxu0 0
  %234 = vmatprep.subr.bf16.mxu0 0
  %235 = vmatpush1.bf16.msra.mxu0 0
  %236 = vmatprep.subr.bf16.mxu0 0
  %237 = vmatpush1.bf16.msra.mxu0 0
  %238 = vmatprep.subr.bf16.mxu0 0
  %239 = vmatpush1.bf16.msra.mxu0 0
  %240 = vmatprep.mubr.bf16.mxu0 0
  %241 = vmatmul.mubr.bf16.gmra.mrb[0].mxu0 %v151
  %v242 = vpop.f32.mrb[0].mxu0
  %v243 = vadd.f32 %v53, %v242
  %v244 = vpop.f32.mrb[0].mxu0
  %v245 = vadd.f32 %v57, %v244
  %v246 = vpop.f32.mrb[0].mxu0
  %v247 = vadd.f32 %v53, %v246
  %v248 = vpop.f32.mrb[0].mxu0
  %v249 = vadd.f32 %v57, %v248
  %250 = vmatprep.mubr.bf16.mxu0 0
  %251 = vmatmul.mubr.bf16.gmra.mrb[0].mxu0 %v154
  %v252 = vpop.f32.mrb[0].mxu0
  %v253 = vadd.f32 %v53, %v252
  %v254 = vpop.f32.mrb[0].mxu0
  %v255 = vadd.f32 %v57, %v254
  %v256 = vpop.f32.mrb[0].mxu0
  %v257 = vadd.f32 %v53, %v256
  %v258 = vpop.f32.mrb[0].mxu0
  %v259 = vadd.f32 %v57, %v258
  %260 = vmatprep.mubr.bf16.mxu0 0
  %261 = vmatmul.mubr.bf16.gmra.mrb[0].mxu0 %v157
  %v262 = vpop.f32.mrb[0].mxu0
  %v263 = vadd.f32 %v53, %v262
  %v264 = vpop.f32.mrb[0].mxu0
  %v265 = vadd.f32 %v57, %v264
  %v266 = vpop.f32.mrb[0].mxu0
  %v267 = vadd.f32 %v53, %v266
  %v268 = vpop.f32.mrb[0].mxu0
  %v269 = vadd.f32 %v57, %v268
  %270 = vmatprep.mubr.bf16.mxu0 0
  %271 = vmatmul.mubr.bf16.gmra.mrb[0].mxu0 %v160
  %v272 = vpop.f32.mrb[0].mxu0
  %v273 = vadd.f32 %v53, %v272
  %v274 = vpop.f32.mrb[0].mxu0
  %v275 = vadd.f32 %v57, %v274
  %v276 = vpop.f32.mrb[0].mxu0
  %v277 = vadd.f32 %v53, %v276
  %v278 = vpop.f32.mrb[0].mxu0
  %v279 = vadd.f32 %v57, %v278
  %280 = vmatprep.mubr.bf16.mxu0 0
  %281 = vmatmul.mubr.bf16.gmra.mrb[0].mxu0 %v163
  %v282 = vpop.f32.mrb[0].mxu0
  %v283 = vadd.f32 %v53, %v282
  %v284 = vpop.f32.mrb[0].mxu0
  %v285 = vadd.f32 %v57, %v284
  %v286 = vpop.f32.mrb[0].mxu0
  %v287 = vadd.f32 %v53, %v286
  %v288 = vpop.f32.mrb[0].mxu0
  %v289 = vadd.f32 %v57, %v288
  %290 = vmatprep.mubr.bf16.mxu0 0
  %291 = vmatmul.mubr.bf16.gmra.mrb[0].mxu0 %v166
  %v292 = vpop.f32.mrb[0].mxu0
  %v293 = vadd.f32 %v53, %v292
  %v294 = vpop.f32.mrb[0].mxu0
  %v295 = vadd.f32 %v57, %v294
  %v296 = vpop.f32.mrb[0].mxu0
  %v297 = vadd.f32 %v53, %v296
  %v298 = vpop.f32.mrb[0].mxu0
  %v299 = vadd.f32 %v57, %v298
  %300 = vmatprep.mubr.bf16.mxu0 0
  %301 = vmatmul.mubr.bf16.gmra.mrb[0].mxu0 %v169
  %v302 = vpop.f32.mrb[0].mxu0
  %v303 = vadd.f32 %v53, %v302
  %v304 = vpop.f32.mrb[0].mxu0
  %v305 = vadd.f32 %v57, %v304
  %v306 = vpop.f32.mrb[0].mxu0
  %v307 = vadd.f32 %v53, %v306
  %v308 = vpop.f32.mrb[0].mxu0
  %v309 = vadd.f32 %v57, %v308
  %310 = vmatprep.mubr.bf16.mxu0 0
  %311 = vmatmul.mubr.bf16.gmra.mrb[0].mxu0 %v172
  %v312 = vpop.f32.mrb[0].mxu0
  %v313 = vadd.f32 %v53, %v312
  %v314 = vpop.f32.mrb[0].mxu0
  %v315 = vadd.f32 %v57, %v314
  %v316 = vpop.f32.mrb[0].mxu0
  %v317 = vadd.f32 %v53, %v316
  %v318 = vpop.f32.mrb[0].mxu0
  %v319 = vadd.f32 %v57, %v318
  %320 = vmatprep.mubr.bf16.mxu0 0
  %321 = vmatmul.mubr.bf16.gmra.mrb[0].mxu0 %v175
  %v322 = vpop.f32.mrb[0].mxu0
  %v323 = vadd.f32 %v53, %v322
  %v324 = vpop.f32.mrb[0].mxu0
  %v325 = vadd.f32 %v57, %v324
  %v326 = vpop.f32.mrb[0].mxu0
  %v327 = vadd.f32 %v53, %v326
  %v328 = vpop.f32.mrb[0].mxu0
  %v329 = vadd.f32 %v57, %v328
  %330 = vmatprep.mubr.bf16.mxu0 0
  %331 = vmatmul.mubr.bf16.gmra.mrb[0].mxu0 %v178
  %v332 = vpop.f32.mrb[0].mxu0
  %v333 = vadd.f32 %v53, %v332
  %v334 = vpop.f32.mrb[0].mxu0
  %v335 = vadd.f32 %v57, %v334
  %v336 = vpop.f32.mrb[0].mxu0
  %v337 = vadd.f32 %v53, %v336
  %v338 = vpop.f32.mrb[0].mxu0
  %v339 = vadd.f32 %v57, %v338
  %340 = vmatprep.mubr.bf16.mxu0 0
  %341 = vmatmul.mubr.bf16.gmra.mrb[0].mxu0 %v181
  %v342 = vpop.f32.mrb[0].mxu0
  %v343 = vadd.f32 %v53, %v342
  %v344 = vpop.f32.mrb[0].mxu0
  %v345 = vadd.f32 %v57, %v344
  %v346 = vpop.f32.mrb[0].mxu0
  %v347 = vadd.f32 %v53, %v346
  %v348 = vpop.f32.mrb[0].mxu0
  %v349 = vadd.f32 %v57, %v348
  %350 = vmatprep.mubr.bf16.mxu0 0
  %351 = vmatmul.mubr.bf16.gmra.mrb[0].mxu0 %v184
  %v352 = vpop.f32.mrb[0].mxu0
  %v353 = vadd.f32 %v53, %v352
  %v354 = vpop.f32.mrb[0].mxu0
  %v355 = vadd.f32 %v57, %v354
  %v356 = vpop.f32.mrb[0].mxu0
  %v357 = vadd.f32 %v53, %v356
  %v358 = vpop.f32.mrb[0].mxu0
  %v359 = vadd.f32 %v57, %v358
  %360 = vmatprep.mubr.bf16.mxu0 0
  %361 = vmatmul.mubr.bf16.gmra.mrb[0].mxu0 %v187
  %v362 = vpop.f32.mrb[0].mxu0
  %v363 = vadd.f32 %v53, %v362
  %v364 = vpop.f32.mrb[0].mxu0
  %v365 = vadd.f32 %v57, %v364
  %v366 = vpop.f32.mrb[0].mxu0
  %v367 = vadd.f32 %v53, %v366
  %v368 = vpop.f32.mrb[0].mxu0
  %v369 = vadd.f32 %v57, %v368
  %370 = vmatprep.mubr.bf16.mxu0 0
  %371 = vmatmul.mubr.bf16.gmra.mrb[0].mxu0 %v190
  %v372 = vpop.f32.mrb[0].mxu0
  %v373 = vadd.f32 %v53, %v372
  %v374 = vpop.f32.mrb[0].mxu0
  %v375 = vadd.f32 %v57, %v374
  %v376 = vpop.f32.mrb[0].mxu0
  %v377 = vadd.f32 %v53, %v376
  %v378 = vpop.f32.mrb[0].mxu0
  %v379 = vadd.f32 %v57, %v378
  %380 = vmatprep.mubr.bf16.mxu0 0
  %381 = vmatmul.mubr.bf16.gmra.mrb[0].mxu0 %v193
  %v382 = vpop.f32.mrb[0].mxu0
  %v383 = vadd.f32 %v53, %v382
  %v384 = vpop.f32.mrb[0].mxu0
  %v385 = vadd.f32 %v57, %v384
  %v386 = vpop.f32.mrb[0].mxu0
  %v387 = vadd.f32 %v53, %v386
  %v388 = vpop.f32.mrb[0].mxu0
  %v389 = vadd.f32 %v57, %v388
  %390 = vmatprep.mubr.bf16.mxu0 0
  %391 = vmatmul.mubr.bf16.gmra.mrb[0].mxu0 %v196
  %v392 = vpop.f32.mrb[0].mxu0
  %v393 = vadd.f32 %v53, %v392
  %v394 = vpop.f32.mrb[0].mxu0
  %v395 = vadd.f32 %v57, %v394
  %v396 = vpop.f32.mrb[0].mxu0
  %v397 = vadd.f32 %v53, %v396
  %v398 = vpop.f32.mrb[0].mxu0
  %v399 = vadd.f32 %v57, %v398
  %400 = vdwg.mxu0
  %v401 = vmax.f32 %v243, 0.0
  %v402 = vmax.f32 %v245, 0.0
  %v403 = vmax.f32 %v247, 0.0
  %v404 = vmax.f32 %v249, 0.0
  %v405 = vmax.f32 %v253, 0.0
  %v406 = vmax.f32 %v255, 0.0
  %v407 = vmax.f32 %v257, 0.0
  %v408 = vmax.f32 %v259, 0.0
  %v409 = vmax.f32 %v263, 0.0
  %v410 = vmax.f32 %v265, 0.0
  %v411 = vmax.f32 %v267, 0.0
  %v412 = vmax.f32 %v269, 0.0
  %v413 = vmax.f32 %v273, 0.0
  %v414 = vmax.f32 %v275, 0.0
  %v415 = vmax.f32 %v277, 0.0
  %v416 = vmax.f32 %v279, 0.0
  %v417 = vmax.f32 %v283, 0.0
  %v418 = vmax.f32 %v285, 0.0
  %v419 = vmax.f32 %v287, 0.0
  %v420 = vmax.f32 %v289, 0.0
  %v421 = vmax.f32 %v293, 0.0
  %v422 = vmax.f32 %v295, 0.0
  %v423 = vmax.f32 %v297, 0.0
  %v424 = vmax.f32 %v299, 0.0
  %v425 = vmax.f32 %v303, 0.0
  %v426 = vmax.f32 %v305, 0.0
  %v427 = vmax.f32 %v307, 0.0
  %v428 = vmax.f32 %v309, 0.0
  %v429 = vmax.f32 %v313, 0.0
  %v430 = vmax.f32 %v315, 0.0
  %v431 = vmax.f32 %v317, 0.0
  %v432 = vmax.f32 %v319, 0.0
  %v433 = vmax.f32 %v323, 0.0
  %v434 = vmax.f32 %v325, 0.0
  %v435 = vmax.f32 %v327, 0.0
  %v436 = vmax.f32 %v329, 0.0
  %v437 = vmax.f32 %v333, 0.0
  %v438 = vmax.f32 %v335, 0.0
  %v439 = vmax.f32 %v337, 0.0
  %v440 = vmax.f32 %v339, 0.0
  %v441 = vmax.f32 %v343, 0.0
  %v442 = vmax.f32 %v345, 0.0
  %v443 = vmax.f32 %v347, 0.0
  %v444 = vmax.f32 %v349, 0.0
  %v445 = vmax.f32 %v353, 0.0
  %v446 = vmax.f32 %v355, 0.0
  %v447 = vmax.f32 %v357, 0.0
  %v448 = vmax.f32 %v359, 0.0
  %v449 = vmax.f32 %v363, 0.0
  %v450 = vmax.f32 %v365, 0.0
  %v451 = vmax.f32 %v367, 0.0
  %v452 = vmax.f32 %v369, 0.0
  %v453 = vmax.f32 %v373, 0.0
  %v454 = vmax.f32 %v375, 0.0
  %v455 = vmax.f32 %v377, 0.0
  %v456 = vmax.f32 %v379, 0.0
  %v457 = vmax.f32 %v383, 0.0
  %v458 = vmax.f32 %v385, 0.0
  %v459 = vmax.f32 %v387, 0.0
  %v460 = vmax.f32 %v389, 0.0
  %v461 = vmax.f32 %v393, 0.0
  %v462 = vmax.f32 %v395, 0.0
  %v463 = vmax.f32 %v397, 0.0
  %v464 = vmax.f32 %v399, 0.0
  %v465 = vpack.c.bf16 %v403, %v401
  %v466 = vpack.c.bf16 %v404, %v402
  %v467 = vpack.c.bf16 %v407, %v405
  %v468 = vpack.c.bf16 %v408, %v406
  %v469 = vpack.c.bf16 %v411, %v409
  %v470 = vpack.c.bf16 %v412, %v410
  %v471 = vpack.c.bf16 %v415, %v413
  %v472 = vpack.c.bf16 %v416, %v414
  %v473 = vpack.c.bf16 %v419, %v417
  %v474 = vpack.c.bf16 %v420, %v418
  %v475 = vpack.c.bf16 %v423, %v421
  %v476 = vpack.c.bf16 %v424, %v422
  %v477 = vpack.c.bf16 %v427, %v425
  %v478 = vpack.c.bf16 %v428, %v426
  %v479 = vpack.c.bf16 %v431, %v429
  %v480 = vpack.c.bf16 %v432, %v430
  %v481 = vpack.c.bf16 %v435, %v433
  %v482 = vpack.c.bf16 %v436, %v434
  %v483 = vpack.c.bf16 %v439, %v437
  %v484 = vpack.c.bf16 %v440, %v438
  %v485 = vpack.c.bf16 %v443, %v441
  %v486 = vpack.c.bf16 %v444, %v442
  %v487 = vpack.c.bf16 %v447, %v445
  %v488 = vpack.c.bf16 %v448, %v446
  %v489 = vpack.c.bf16 %v451, %v449
  %v490 = vpack.c.bf16 %v452, %v450
  %v491 = vpack.c.bf16 %v455, %v453
  %v492 = vpack.c.bf16 %v456, %v454
  %v493 = vpack.c.bf16 %v459, %v457
  %v494 = vpack.c.bf16 %v460, %v458
  %v495 = vpack.c.bf16 %v463, %v461
  %v496 = vpack.c.bf16 %v464, %v462
  %v529 = vunpack.c.l.b16 %v465
  %v530 = vunpack.c.l.b16 %v466
  %v531 = vunpack.c.h.b16 %v465
  %v532 = vunpack.c.h.b16 %v466
  %v533 = vunpack.c.l.b16 %v467
  %v534 = vunpack.c.l.b16 %v468
  %v535 = vunpack.c.h.b16 %v467
  %v536 = vunpack.c.h.b16 %v468
  %v537 = vunpack.c.l.b16 %v469
  %v538 = vunpack.c.l.b16 %v470
  %v539 = vunpack.c.h.b16 %v469
  %v540 = vunpack.c.h.b16 %v470
  %v541 = vunpack.c.l.b16 %v471
  %v542 = vunpack.c.l.b16 %v472
  %v543 = vunpack.c.h.b16 %v471
  %v544 = vunpack.c.h.b16 %v472
  %v545 = vunpack.c.l.b16 %v473
  %v546 = vunpack.c.l.b16 %v474
  %v547 = vunpack.c.h.b16 %v473
  %v548 = vunpack.c.h.b16 %v474
  %v549 = vunpack.c.l.b16 %v475
  %v550 = vunpack.c.l.b16 %v476
  %v551 = vunpack.c.h.b16 %v475
  %v552 = vunpack.c.h.b16 %v476
  %v553 = vunpack.c.l.b16 %v477
  %v554 = vunpack.c.l.b16 %v478
  %v555 = vunpack.c.h.b16 %v477
  %v556 = vunpack.c.h.b16 %v478
  %v557 = vunpack.c.l.b16 %v479
  %v558 = vunpack.c.l.b16 %v480
  %v559 = vunpack.c.h.b16 %v479
  %v560 = vunpack.c.h.b16 %v480
  %v561 = vunpack.c.l.b16 %v481
  %v562 = vunpack.c.l.b16 %v482
  %v563 = vunpack.c.h.b16 %v481
  %v564 = vunpack.c.h.b16 %v482
  %v565 = vunpack.c.l.b16 %v483
  %v566 = vunpack.c.l.b16 %v484
  %v567 = vunpack.c.h.b16 %v483
  %v568 = vunpack.c.h.b16 %v484
  %v569 = vunpack.c.l.b16 %v485
  %v570 = vunpack.c.l.b16 %v486
  %v571 = vunpack.c.h.b16 %v485
  %v572 = vunpack.c.h.b16 %v486
  %v573 = vunpack.c.l.b16 %v487
  %v574 = vunpack.c.l.b16 %v488
  %v575 = vunpack.c.h.b16 %v487
  %v576 = vunpack.c.h.b16 %v488
  %v577 = vunpack.c.l.b16 %v489
  %v578 = vunpack.c.l.b16 %v490
  %v579 = vunpack.c.h.b16 %v489
  %v580 = vunpack.c.h.b16 %v490
  %v581 = vunpack.c.l.b16 %v491
  %v582 = vunpack.c.l.b16 %v492
  %v583 = vunpack.c.h.b16 %v491
  %v584 = vunpack.c.h.b16 %v492
  %v585 = vunpack.c.l.b16 %v493
  %v586 = vunpack.c.l.b16 %v494
  %v587 = vunpack.c.h.b16 %v493
  %v588 = vunpack.c.h.b16 %v494
  %v589 = vunpack.c.l.b16 %v495
  %v590 = vunpack.c.l.b16 %v496
  %v591 = vunpack.c.h.b16 %v495
  %v592 = vunpack.c.h.b16 %v496
  %v593 = vpack.c.b16 %v530, %v529
  %v594 = vpack.c.b16 %v532, %v531
  %v595 = vpack.c.b16 %v534, %v533
  %v596 = vpack.c.b16 %v536, %v535
  %v597 = vpack.c.b16 %v538, %v537
  %v598 = vpack.c.b16 %v540, %v539
  %v599 = vpack.c.b16 %v542, %v541
  %v600 = vpack.c.b16 %v544, %v543
  %v601 = vpack.c.b16 %v546, %v545
  %v602 = vpack.c.b16 %v548, %v547
  %v603 = vpack.c.b16 %v550, %v549
  %v604 = vpack.c.b16 %v552, %v551
  %v605 = vpack.c.b16 %v554, %v553
  %v606 = vpack.c.b16 %v556, %v555
  %v607 = vpack.c.b16 %v558, %v557
  %v608 = vpack.c.b16 %v560, %v559
  %v609 = vpack.c.b16 %v562, %v561
  %v610 = vpack.c.b16 %v564, %v563
  %v611 = vpack.c.b16 %v566, %v565
  %v612 = vpack.c.b16 %v568, %v567
  %v613 = vpack.c.b16 %v570, %v569
  %v614 = vpack.c.b16 %v572, %v571
  %v615 = vpack.c.b16 %v574, %v573
  %v616 = vpack.c.b16 %v576, %v575
  %v617 = vpack.c.b16 %v578, %v577
  %v618 = vpack.c.b16 %v580, %v579
  %v619 = vpack.c.b16 %v582, %v581
  %v620 = vpack.c.b16 %v584, %v583
  %v621 = vpack.c.b16 %v586, %v585
  %v622 = vpack.c.b16 %v588, %v587
  %v623 = vpack.c.b16 %v590, %v589
  %v624 = vpack.c.b16 %v592, %v591
  %657 = vst [vmem:[%s3] sm:$0xff] %v593
  %658 = vst [vmem:[%s3 + $0x8] sm:$0xff] %v594
  %659 = vst [vmem:[%s3 + $0x10] sm:$0xff] %v595
  %660 = vst [vmem:[%s3 + $0x18] sm:$0xff] %v596
  %661 = vst [vmem:[%s3 + $0x20] sm:$0xff] %v597
  %662 = vst [vmem:[%s3 + $0x28] sm:$0xff] %v598
  %663 = vst [vmem:[%s3 + $0x30] sm:$0xff] %v599
  %664 = vst [vmem:[%s3 + $0x38] sm:$0xff] %v600
  %665 = vst [vmem:[%s3 + $0x40] sm:$0xff] %v601
  %666 = vst [vmem:[%s3 + $0x48] sm:$0xff] %v602
  %667 = vst [vmem:[%s3 + $0x50] sm:$0xff] %v603
  %668 = vst [vmem:[%s3 + $0x58] sm:$0xff] %v604
  %669 = vst [vmem:[%s3 + $0x60] sm:$0xff] %v605
  %670 = vst [vmem:[%s3 + $0x68] sm:$0xff] %v606
  %671 = vst [vmem:[%s3 + $0x70] sm:$0xff] %v607
  %672 = vst [vmem:[%s3 + $0x78] sm:$0xff] %v608
  %673 = vst [vmem:[%s3 + $0x80] sm:$0xff] %v609
  %674 = vst [vmem:[%s3 + $0x88] sm:$0xff] %v610
  %675 = vst [vmem:[%s3 + $0x90] sm:$0xff] %v611
  %676 = vst [vmem:[%s3 + $0x98] sm:$0xff] %v612
  %677 = vst [vmem:[%s3 + $0xa0] sm:$0xff] %v613
  %678 = vst [vmem:[%s3 + $0xa8] sm:$0xff] %v614
  %679 = vst [vmem:[%s3 + $0xb0] sm:$0xff] %v615
  %680 = vst [vmem:[%s3 + $0xb8] sm:$0xff] %v616
  %681 = vst [vmem:[%s3 + $0xc0] sm:$0xff] %v617
  %682 = vst [vmem:[%s3 + $0xc8] sm:$0xff] %v618
  %683 = vst [vmem:[%s3 + $0xd0] sm:$0xff] %v619
  %684 = vst [vmem:[%s3 + $0xd8] sm:$0xff] %v620
  %685 = vst [vmem:[%s3 + $0xe0] sm:$0xff] %v621
  %686 = vst [vmem:[%s3 + $0xe8] sm:$0xff] %v622
  %687 = vst [vmem:[%s3 + $0xf0] sm:$0xff] %v623
  %688 = vst [vmem:[%s3 + $0xf8] sm:$0xff] %v624
  // Predicated region
  $region14: #{forward.4} parent=0 // pred_check
    _
  $region15: #{forward.4} parent=0 // pred_check_branch
    %690 = sbr.rel (0) target = $region17
  $region16: #{forward.4} parent=0 // pred_region
    _
  $region17: #{forward.4} parent=0 // pred_fallthru
    _
  // Predicated region
  $region18: #{forward.4} parent=0 // pred_check
    _
  $region19: #{forward.4} parent=0 // pred_check_branch
    %692 = sbr.rel (0) target = $region21
  $region20: #{forward.4} parent=0 // pred_region
    _
  $region21: #{forward.4} parent=0 // pred_fallthru
    _

// kernel: forward.5
$region0: #{forward.5}
  #allocation0 [shape = 'u32[]', space=smem, size = 0x4, offset = 0x4, fixed_abs, tag = 'smem constant byte address 0x4 - core index']
  #allocation1 [shape = 'u32[144,128]{1,0:T(1,128)}', space=vmem, size = 0x12000, scoped, tag = 'internal scratch']
  %s0 = inlined_call_operand.vmem [shape: bf16[256,256], index: 0, kind: input, shape index: {}]
  %s1 = inlined_call_operand.vmem [shape: bf16[256,256], index: 1, kind: input, shape index: {}]
  %s2 = inlined_call_operand.vmem [shape: f32[1,256], index: 2, kind: input, shape index: {}]
  %s3 = inlined_call_operand.vmem [shape: bf16[256,256], index: 3, kind: output, shape index: {}]
  %s4 = sld [smem:[#allocation0]]
  $region22: #{forward.5} parent=0
    _
  %s6 = ssub.s32 1, %s4
  %s7 = scalar_select 0, %s6, %s4
  // Predicated region
  $region2: #{forward.5} parent=0 // pred_check
    _
  $region3: #{forward.5} parent=0 // pred_check_branch
    %9 = sbr.rel (0) target = $region5
  $region4: #{forward.5} parent=0 // pred_region
    _
  $region5: #{forward.5} parent=0 // pred_fallthru
    _
  // Predicated region
  $region6: #{forward.5} parent=0 // pred_check
    _
  $region7: #{forward.5} parent=0 // pred_check_branch
    %11 = sbr.rel (0) target = $region9
  $region8: #{forward.5} parent=0 // pred_region
    _
  $region9: #{forward.5} parent=0 // pred_fallthru
    _
  // Predicated region
  $region10: #{forward.5} parent=0 // pred_check
    _
  $region11: #{forward.5} parent=0 // pred_check_branch
    %13 = sbr.rel (0) target = $region13
  $region12: #{forward.5} parent=0 // pred_region
    _
  $region13: #{forward.5} parent=0 // pred_fallthru
    _
  %v14 = vld [vmem:[%s0] sm:$0xff]
  %v15 = vld [vmem:[%s0 + $0x8] sm:$0xff]
  %v16 = vld [vmem:[%s0 + $0x10] sm:$0xff]
  %v17 = vld [vmem:[%s0 + $0x18] sm:$0xff]
  %v18 = vld [vmem:[%s0 + $0x20] sm:$0xff]
  %v19 = vld [vmem:[%s0 + $0x28] sm:$0xff]
  %v20 = vld [vmem:[%s0 + $0x30] sm:$0xff]
  %v21 = vld [vmem:[%s0 + $0x38] sm:$0xff]
  %v22 = vld [vmem:[%s0 + $0x40] sm:$0xff]
  %v23 = vld [vmem:[%s0 + $0x48] sm:$0xff]
  %v24 = vld [vmem:[%s0 + $0x50] sm:$0xff]
  %v25 = vld [vmem:[%s0 + $0x58] sm:$0xff]
  %v26 = vld [vmem:[%s0 + $0x60] sm:$0xff]
  %v27 = vld [vmem:[%s0 + $0x68] sm:$0xff]
  %v28 = vld [vmem:[%s0 + $0x70] sm:$0xff]
  %v29 = vld [vmem:[%s0 + $0x78] sm:$0xff]
  %v30 = vld [vmem:[%s0 + $0x80] sm:$0xff]
  %v31 = vld [vmem:[%s0 + $0x88] sm:$0xff]
  %v32 = vld [vmem:[%s0 + $0x90] sm:$0xff]
  %v33 = vld [vmem:[%s0 + $0x98] sm:$0xff]
  %v34 = vld [vmem:[%s0 + $0xa0] sm:$0xff]
  %v35 = vld [vmem:[%s0 + $0xa8] sm:$0xff]
  %v36 = vld [vmem:[%s0 + $0xb0] sm:$0xff]
  %v37 = vld [vmem:[%s0 + $0xb8] sm:$0xff]
  %v38 = vld [vmem:[%s0 + $0xc0] sm:$0xff]
  %v39 = vld [vmem:[%s0 + $0xc8] sm:$0xff]
  %v40 = vld [vmem:[%s0 + $0xd0] sm:$0xff]
  %v41 = vld [vmem:[%s0 + $0xd8] sm:$0xff]
  %v42 = vld [vmem:[%s0 + $0xe0] sm:$0xff]
  %v43 = vld [vmem:[%s0 + $0xe8] sm:$0xff]
  %v44 = vld [vmem:[%s0 + $0xf0] sm:$0xff]
  %v45 = vld [vmem:[%s0 + $0xf8] sm:$0xff]
  %v46 = vld [vmem:[%s1] sm:$0xff]
  %v47 = vld [vmem:[%s1 + $0x8] sm:$0xff]
  %v48 = vld [vmem:[%s1 + $0x10] sm:$0xff]
  %v49 = vld [vmem:[%s1 + $0x18] sm:$0xff]
  %v50 = vld [vmem:[%s1 + $0x20] sm:$0xff]
  %v51 = vld [vmem:[%s1 + $0x28] sm:$0xff]
  %v52 = vld [vmem:[%s1 + $0x30] sm:$0xff]
  %v53 = vld [vmem:[%s1 + $0x38] sm:$0xff]
  %v54 = vld [vmem:[%s1 + $0x40] sm:$0xff]
  %v55 = vld [vmem:[%s1 + $0x48] sm:$0xff]
  %v56 = vld [vmem:[%s1 + $0x50] sm:$0xff]
  %v57 = vld [vmem:[%s1 + $0x58] sm:$0xff]
  %v58 = vld [vmem:[%s1 + $0x60] sm:$0xff]
  %v59 = vld [vmem:[%s1 + $0x68] sm:$0xff]
  %v60 = vld [vmem:[%s1 + $0x70] sm:$0xff]
  %v61 = vld [vmem:[%s1 + $0x78] sm:$0xff]
  %v62 = vld [vmem:[%s1 + $0x80] sm:$0xff]
  %v63 = vld [vmem:[%s1 + $0x88] sm:$0xff]
  %v64 = vld [vmem:[%s1 + $0x90] sm:$0xff]
  %v65 = vld [vmem:[%s1 + $0x98] sm:$0xff]
  %v66 = vld [vmem:[%s1 + $0xa0] sm:$0xff]
  %v67 = vld [vmem:[%s1 + $0xa8] sm:$0xff]
  %v68 = vld [vmem:[%s1 + $0xb0] sm:$0xff]
  %v69 = vld [vmem:[%s1 + $0xb8] sm:$0xff]
  %v70 = vld [vmem:[%s1 + $0xc0] sm:$0xff]
  %v71 = vld [vmem:[%s1 + $0xc8] sm:$0xff]
  %v72 = vld [vmem:[%s1 + $0xd0] sm:$0xff]
  %v73 = vld [vmem:[%s1 + $0xd8] sm:$0xff]
  %v74 = vld [vmem:[%s1 + $0xe0] sm:$0xff]
  %v75 = vld [vmem:[%s1 + $0xe8] sm:$0xff]
  %v76 = vld [vmem:[%s1 + $0xf0] sm:$0xff]
  %v77 = vld [vmem:[%s1 + $0xf8] sm:$0xff]
  %v78 = vld [vmem:[%s2] sm:$0x3]
  %v80 = vlaneseq
  %v81 = vshrl.u32 %v80, 7
  %v82 = vsub.s32 0, %v81
  %v83 = vrot.slane %v78, %v82
  %v84 = vlaneseq
  %v85 = vshrl.u32 %v84, 7
  %v86 = vsub.s32 1, %v85
  %v87 = vrot.slane %v78, %v86
  %v122 = vunpack.c.l.b16 %v14
  %v123 = vunpack.c.h.b16 %v14
  %v124 = vunpack.c.l.b16 %v15
  %v125 = vunpack.c.h.b16 %v15
  %v126 = vunpack.c.l.b16 %v16
  %v127 = vunpack.c.h.b16 %v16
  %v128 = vunpack.c.l.b16 %v17
  %v129 = vunpack.c.h.b16 %v17
  %v130 = vunpack.c.l.b16 %v18
  %v131 = vunpack.c.h.b16 %v18
  %v132 = vunpack.c.l.b16 %v19
  %v133 = vunpack.c.h.b16 %v19
  %v134 = vunpack.c.l.b16 %v20
  %v135 = vunpack.c.h.b16 %v20
  %v136 = vunpack.c.l.b16 %v21
  %v137 = vunpack.c.h.b16 %v21
  %v138 = vunpack.c.l.b16 %v22
  %v139 = vunpack.c.h.b16 %v22
  %v140 = vunpack.c.l.b16 %v23
  %v141 = vunpack.c.h.b16 %v23
  %v142 = vunpack.c.l.b16 %v24
  %v143 = vunpack.c.h.b16 %v24
  %v144 = vunpack.c.l.b16 %v25
  %v145 = vunpack.c.h.b16 %v25
  %v146 = vunpack.c.l.b16 %v26
  %v147 = vunpack.c.h.b16 %v26
  %v148 = vunpack.c.l.b16 %v27
  %v149 = vunpack.c.h.b16 %v27
  %v150 = vunpack.c.l.b16 %v28
  %v151 = vunpack.c.h.b16 %v28
  %v152 = vunpack.c.l.b16 %v29
  %v153 = vunpack.c.h.b16 %v29
  %v154 = vunpack.c.l.b16 %v30
  %v155 = vunpack.c.h.b16 %v30
  %v156 = vunpack.c.l.b16 %v31
  %v157 = vunpack.c.h.b16 %v31
  %v158 = vunpack.c.l.b16 %v32
  %v159 = vunpack.c.h.b16 %v32
  %v160 = vunpack.c.l.b16 %v33
  %v161 = vunpack.c.h.b16 %v33
  %v162 = vunpack.c.l.b16 %v34
  %v163 = vunpack.c.h.b16 %v34
  %v164 = vunpack.c.l.b16 %v35
  %v165 = vunpack.c.h.b16 %v35
  %v166 = vunpack.c.l.b16 %v36
  %v167 = vunpack.c.h.b16 %v36
  %v168 = vunpack.c.l.b16 %v37
  %v169 = vunpack.c.h.b16 %v37
  %v170 = vunpack.c.l.b16 %v38
  %v171 = vunpack.c.h.b16 %v38
  %v172 = vunpack.c.l.b16 %v39
  %v173 = vunpack.c.h.b16 %v39
  %v174 = vunpack.c.l.b16 %v40
  %v175 = vunpack.c.h.b16 %v40
  %v176 = vunpack.c.l.b16 %v41
  %v177 = vunpack.c.h.b16 %v41
  %v178 = vunpack.c.l.b16 %v42
  %v179 = vunpack.c.h.b16 %v42
  %v180 = vunpack.c.l.b16 %v43
  %v181 = vunpack.c.h.b16 %v43
  %v182 = vunpack.c.l.b16 %v44
  %v183 = vunpack.c.h.b16 %v44
  %v184 = vunpack.c.l.b16 %v45
  %v185 = vunpack.c.h.b16 %v45
  %v186 = vpack.c.b16 %v124, %v122
  %v187 = vpack.c.b16 %v125, %v123
  %v188 = vpack.c.b16 %v128, %v126
  %v189 = vpack.c.b16 %v129, %v127
  %v190 = vpack.c.b16 %v132, %v130
  %v191 = vpack.c.b16 %v133, %v131
  %v192 = vpack.c.b16 %v136, %v134
  %v193 = vpack.c.b16 %v137, %v135
  %v194 = vpack.c.b16 %v140, %v138
  %v195 = vpack.c.b16 %v141, %v139
  %v196 = vpack.c.b16 %v144, %v142
  %v197 = vpack.c.b16 %v145, %v143
  %v198 = vpack.c.b16 %v148, %v146
  %v199 = vpack.c.b16 %v149, %v147
  %v200 = vpack.c.b16 %v152, %v150
  %v201 = vpack.c.b16 %v153, %v151
  %v202 = vpack.c.b16 %v156, %v154
  %v203 = vpack.c.b16 %v157, %v155
  %v204 = vpack.c.b16 %v160, %v158
  %v205 = vpack.c.b16 %v161, %v159
  %v206 = vpack.c.b16 %v164, %v162
  %v207 = vpack.c.b16 %v165, %v163
  %v208 = vpack.c.b16 %v168, %v166
  %v209 = vpack.c.b16 %v169, %v167
  %v210 = vpack.c.b16 %v172, %v170
  %v211 = vpack.c.b16 %v173, %v171
  %v212 = vpack.c.b16 %v176, %v174
  %v213 = vpack.c.b16 %v177, %v175
  %v214 = vpack.c.b16 %v180, %v178
  %v215 = vpack.c.b16 %v181, %v179
  %v216 = vpack.c.b16 %v184, %v182
  %v217 = vpack.c.b16 %v185, %v183
  %v282 = vunpack.c.l.b16 %v46
  %v283 = vunpack.c.h.b16 %v46
  %v284 = vunpack.c.l.b16 %v47
  %v285 = vunpack.c.h.b16 %v47
  %v286 = vunpack.c.l.b16 %v48
  %v287 = vunpack.c.h.b16 %v48
  %v288 = vunpack.c.l.b16 %v49
  %v289 = vunpack.c.h.b16 %v49
  %v290 = vunpack.c.l.b16 %v50
  %v291 = vunpack.c.h.b16 %v50
  %v292 = vunpack.c.l.b16 %v51
  %v293 = vunpack.c.h.b16 %v51
  %v294 = vunpack.c.l.b16 %v52
  %v295 = vunpack.c.h.b16 %v52
  %v296 = vunpack.c.l.b16 %v53
  %v297 = vunpack.c.h.b16 %v53
  %v298 = vunpack.c.l.b16 %v54
  %v299 = vunpack.c.h.b16 %v54
  %v300 = vunpack.c.l.b16 %v55
  %v301 = vunpack.c.h.b16 %v55
  %v302 = vunpack.c.l.b16 %v56
  %v303 = vunpack.c.h.b16 %v56
  %v304 = vunpack.c.l.b16 %v57
  %v305 = vunpack.c.h.b16 %v57
  %v306 = vunpack.c.l.b16 %v58
  %v307 = vunpack.c.h.b16 %v58
  %v308 = vunpack.c.l.b16 %v59
  %v309 = vunpack.c.h.b16 %v59
  %v310 = vunpack.c.l.b16 %v60
  %v311 = vunpack.c.h.b16 %v60
  %v312 = vunpack.c.l.b16 %v61
  %v313 = vunpack.c.h.b16 %v61
  %v314 = vunpack.c.l.b16 %v62
  %v315 = vunpack.c.h.b16 %v62
  %v316 = vunpack.c.l.b16 %v63
  %v317 = vunpack.c.h.b16 %v63
  %v318 = vunpack.c.l.b16 %v64
  %v319 = vunpack.c.h.b16 %v64
  %v320 = vunpack.c.l.b16 %v65
  %v321 = vunpack.c.h.b16 %v65
  %v322 = vunpack.c.l.b16 %v66
  %v323 = vunpack.c.h.b16 %v66
  %v324 = vunpack.c.l.b16 %v67
  %v325 = vunpack.c.h.b16 %v67
  %v326 = vunpack.c.l.b16 %v68
  %v327 = vunpack.c.h.b16 %v68
  %v328 = vunpack.c.l.b16 %v69
  %v329 = vunpack.c.h.b16 %v69
  %v330 = vunpack.c.l.b16 %v70
  %v331 = vunpack.c.h.b16 %v70
  %v332 = vunpack.c.l.b16 %v71
  %v333 = vunpack.c.h.b16 %v71
  %v334 = vunpack.c.l.b16 %v72
  %v335 = vunpack.c.h.b16 %v72
  %v336 = vunpack.c.l.b16 %v73
  %v337 = vunpack.c.h.b16 %v73
  %v338 = vunpack.c.l.b16 %v74
  %v339 = vunpack.c.h.b16 %v74
  %v340 = vunpack.c.l.b16 %v75
  %v341 = vunpack.c.h.b16 %v75
  %v342 = vunpack.c.l.b16 %v76
  %v343 = vunpack.c.h.b16 %v76
  %v344 = vunpack.c.l.b16 %v77
  %v345 = vunpack.c.h.b16 %v77
  %v346 = vpack.c.b16 %v284, %v282
  %v347 = vpack.c.b16 %v285, %v283
  %v348 = vpack.c.b16 %v288, %v286
  %v349 = vpack.c.b16 %v289, %v287
  %v350 = vpack.c.b16 %v292, %v290
  %v351 = vpack.c.b16 %v293, %v291
  %v352 = vpack.c.b16 %v296, %v294
  %v353 = vpack.c.b16 %v297, %v295
  %v354 = vpack.c.b16 %v300, %v298
  %v355 = vpack.c.b16 %v301, %v299
  %v356 = vpack.c.b16 %v304, %v302
  %v357 = vpack.c.b16 %v305, %v303
  %v358 = vpack.c.b16 %v308, %v306
  %v359 = vpack.c.b16 %v309, %v307
  %v360 = vpack.c.b16 %v312, %v310
  %v361 = vpack.c.b16 %v313, %v311
  %v362 = vpack.c.b16 %v316, %v314
  %v363 = vpack.c.b16 %v317, %v315
  %v364 = vpack.c.b16 %v320, %v318
  %v365 = vpack.c.b16 %v321, %v319
  %v366 = vpack.c.b16 %v324, %v322
  %v367 = vpack.c.b16 %v325, %v323
  %v368 = vpack.c.b16 %v328, %v326
  %v369 = vpack.c.b16 %v329, %v327
  %v370 = vpack.c.b16 %v332, %v330
  %v371 = vpack.c.b16 %v333, %v331
  %v372 = vpack.c.b16 %v336, %v334
  %v373 = vpack.c.b16 %v337, %v335
  %v374 = vpack.c.b16 %v340, %v338
  %v375 = vpack.c.b16 %v341, %v339
  %v376 = vpack.c.b16 %v344, %v342
  %v377 = vpack.c.b16 %v345, %v343
  %410 = vmatprep.subr.bf16.mxu0 %v347
  %411 = vmatpush1.bf16.msra.mxu0 %v346
  %412 = vmatprep.subr.bf16.mxu0 %v349
  %413 = vmatpush1.bf16.msra.mxu0 %v348
  %414 = vmatprep.subr.bf16.mxu0 %v351
  %415 = vmatpush1.bf16.msra.mxu0 %v350
  %416 = vmatprep.subr.bf16.mxu0 %v353
  %417 = vmatpush1.bf16.msra.mxu0 %v352
  %418 = vmatprep.subr.bf16.mxu0 %v355
  %419 = vmatpush1.bf16.msra.mxu0 %v354
  %420 = vmatprep.subr.bf16.mxu0 %v357
  %421 = vmatpush1.bf16.msra.mxu0 %v356
  %422 = vmatprep.subr.bf16.mxu0 %v359
  %423 = vmatpush1.bf16.msra.mxu0 %v358
  %424 = vmatprep.subr.bf16.mxu0 %v361
  %425 = vmatpush1.bf16.msra.mxu0 %v360
  %426 = vmatprep.subr.bf16.mxu0 %v363
  %427 = vmatpush1.bf16.msra.mxu0 %v362
  %428 = vmatprep.subr.bf16.mxu0 %v365
  %429 = vmatpush1.bf16.msra.mxu0 %v364
  %430 = vmatprep.subr.bf16.mxu0 %v367
  %431 = vmatpush1.bf16.msra.mxu0 %v366
  %432 = vmatprep.subr.bf16.mxu0 %v369
  %433 = vmatpush1.bf16.msra.mxu0 %v368
  %434 = vmatprep.subr.bf16.mxu0 %v371
  %435 = vmatpush1.bf16.msra.mxu0 %v370
  %436 = vmatprep.subr.bf16.mxu0 %v373
  %437 = vmatpush1.bf16.msra.mxu0 %v372
  %438 = vmatprep.subr.bf16.mxu0 %v375
  %439 = vmatpush1.bf16.msra.mxu0 %v374
  %440 = vmatprep.subr.bf16.mxu0 %v377
  %441 = vmatpush1.bf16.msra.mxu0 %v376
  %442 = vmatprep.mubr.bf16.mxu0 %v187
  %443 = vmatmul.mubr.bf16.gmra.mrb[0].mxu0 %v186
  %v444 = vpop.f32.mrb[0].mxu0
  %v445 = vadd.f32 %v83, %v444
  %v446 = vpop.f32.mrb[0].mxu0
  %v447 = vadd.f32 %v87, %v446
  %v448 = vpop.f32.mrb[0].mxu0
  %v449 = vadd.f32 %v83, %v448
  %v450 = vpop.f32.mrb[0].mxu0
  %v451 = vadd.f32 %v87, %v450
  %452 = vmatprep.mubr.bf16.mxu0 %v189
  %453 = vmatmul.mubr.bf16.gmra.mrb[0].mxu0 %v188
  %v454 = vpop.f32.mrb[0].mxu0
  %v455 = vadd.f32 %v83, %v454
  %v456 = vpop.f32.mrb[0].mxu0
  %v457 = vadd.f32 %v87, %v456
  %v458 = vpop.f32.mrb[0].mxu0
  %v459 = vadd.f32 %v83, %v458
  %v460 = vpop.f32.mrb[0].mxu0
  %v461 = vadd.f32 %v87, %v460
  %462 = vmatprep.mubr.bf16.mxu0 %v191
  %463 = vmatmul.mubr.bf16.gmra.mrb[0].mxu0 %v190
  %v464 = vpop.f32.mrb[0].mxu0
  %v465 = vadd.f32 %v83, %v464
  %v466 = vpop.f32.mrb[0].mxu0
  %v467 = vadd.f32 %v87, %v466
  %v468 = vpop.f32.mrb[0].mxu0
  %v469 = vadd.f32 %v83, %v468
  %v470 = vpop.f32.mrb[0].mxu0
  %v471 = vadd.f32 %v87, %v470
  %472 = vmatprep.mubr.bf16.mxu0 %v193
  %473 = vmatmul.mubr.bf16.gmra.mrb[0].mxu0 %v192
  %v474 = vpop.f32.mrb[0].mxu0
  %v475 = vadd.f32 %v83, %v474
  %v476 = vpop.f32.mrb[0].mxu0
  %v477 = vadd.f32 %v87, %v476
  %v478 = vpop.f32.mrb[0].mxu0
  %v479 = vadd.f32 %v83, %v478
  %v480 = vpop.f32.mrb[0].mxu0
  %v481 = vadd.f32 %v87, %v480
  %482 = vmatprep.mubr.bf16.mxu0 %v195
  %483 = vmatmul.mubr.bf16.gmra.mrb[0].mxu0 %v194
  %v484 = vpop.f32.mrb[0].mxu0
  %v485 = vadd.f32 %v83, %v484
  %v486 = vpop.f32.mrb[0].mxu0
  %v487 = vadd.f32 %v87, %v486
  %v488 = vpop.f32.mrb[0].mxu0
  %v489 = vadd.f32 %v83, %v488
  %v490 = vpop.f32.mrb[0].mxu0
  %v491 = vadd.f32 %v87, %v490
  %492 = vmatprep.mubr.bf16.mxu0 %v197
  %493 = vmatmul.mubr.bf16.gmra.mrb[0].mxu0 %v196
  %v494 = vpop.f32.mrb[0].mxu0
  %v495 = vadd.f32 %v83, %v494
  %v496 = vpop.f32.mrb[0].mxu0
  %v497 = vadd.f32 %v87, %v496
  %v498 = vpop.f32.mrb[0].mxu0
  %v499 = vadd.f32 %v83, %v498
  %v500 = vpop.f32.mrb[0].mxu0
  %v501 = vadd.f32 %v87, %v500
  %502 = vmatprep.mubr.bf16.mxu0 %v199
  %503 = vmatmul.mubr.bf16.gmra.mrb[0].mxu0 %v198
  %v504 = vpop.f32.mrb[0].mxu0
  %v505 = vadd.f32 %v83, %v504
  %v506 = vpop.f32.mrb[0].mxu0
  %v507 = vadd.f32 %v87, %v506
  %v508 = vpop.f32.mrb[0].mxu0
  %v509 = vadd.f32 %v83, %v508
  %v510 = vpop.f32.mrb[0].mxu0
  %v511 = vadd.f32 %v87, %v510
  %512 = vmatprep.mubr.bf16.mxu0 %v201
  %513 = vmatmul.mubr.bf16.gmra.mrb[0].mxu0 %v200
  %v514 = vpop.f32.mrb[0].mxu0
  %v515 = vadd.f32 %v83, %v514
  %v516 = vpop.f32.mrb[0].mxu0
  %v517 = vadd.f32 %v87, %v516
  %v518 = vpop.f32.mrb[0].mxu0
  %v519 = vadd.f32 %v83, %v518
  %v520 = vpop.f32.mrb[0].mxu0
  %v521 = vadd.f32 %v87, %v520
  %522 = vmatprep.mubr.bf16.mxu0 %v203
  %523 = vmatmul.mubr.bf16.gmra.mrb[0].mxu0 %v202
  %v524 = vpop.f32.mrb[0].mxu0
  %v525 = vadd.f32 %v83, %v524
  %v526 = vpop.f32.mrb[0].mxu0
  %v527 = vadd.f32 %v87, %v526
  %v528 = vpop.f32.mrb[0].mxu0
  %v529 = vadd.f32 %v83, %v528
  %v530 = vpop.f32.mrb[0].mxu0
  %v531 = vadd.f32 %v87, %v530
  %532 = vmatprep.mubr.bf16.mxu0 %v205
  %533 = vmatmul.mubr.bf16.gmra.mrb[0].mxu0 %v204
  %v534 = vpop.f32.mrb[0].mxu0
  %v535 = vadd.f32 %v83, %v534
  %v536 = vpop.f32.mrb[0].mxu0
  %v537 = vadd.f32 %v87, %v536
  %v538 = vpop.f32.mrb[0].mxu0
  %v539 = vadd.f32 %v83, %v538
  %v540 = vpop.f32.mrb[0].mxu0
  %v541 = vadd.f32 %v87, %v540
  %542 = vmatprep.mubr.bf16.mxu0 %v207
  %543 = vmatmul.mubr.bf16.gmra.mrb[0].mxu0 %v206
  %v544 = vpop.f32.mrb[0].mxu0
  %v545 = vadd.f32 %v83, %v544
  %v546 = vpop.f32.mrb[0].mxu0
  %v547 = vadd.f32 %v87, %v546
  %v548 = vpop.f32.mrb[0].mxu0
  %v549 = vadd.f32 %v83, %v548
  %v550 = vpop.f32.mrb[0].mxu0
  %v551 = vadd.f32 %v87, %v550
  %552 = vmatprep.mubr.bf16.mxu0 %v209
  %553 = vmatmul.mubr.bf16.gmra.mrb[0].mxu0 %v208
  %v554 = vpop.f32.mrb[0].mxu0
  %v555 = vadd.f32 %v83, %v554
  %v556 = vpop.f32.mrb[0].mxu0
  %v557 = vadd.f32 %v87, %v556
  %v558 = vpop.f32.mrb[0].mxu0
  %v559 = vadd.f32 %v83, %v558
  %v560 = vpop.f32.mrb[0].mxu0
  %v561 = vadd.f32 %v87, %v560
  %562 = vmatprep.mubr.bf16.mxu0 %v211
  %563 = vmatmul.mubr.bf16.gmra.mrb[0].mxu0 %v210
  %v564 = vpop.f32.mrb[0].mxu0
  %v565 = vadd.f32 %v83, %v564
  %v566 = vpop.f32.mrb[0].mxu0
  %v567 = vadd.f32 %v87, %v566
  %v568 = vpop.f32.mrb[0].mxu0
  %v569 = vadd.f32 %v83, %v568
  %v570 = vpop.f32.mrb[0].mxu0
  %v571 = vadd.f32 %v87, %v570
  %572 = vmatprep.mubr.bf16.mxu0 %v213
  %573 = vmatmul.mubr.bf16.gmra.mrb[0].mxu0 %v212
  %v574 = vpop.f32.mrb[0].mxu0
  %v575 = vadd.f32 %v83, %v574
  %v576 = vpop.f32.mrb[0].mxu0
  %v577 = vadd.f32 %v87, %v576
  %v578 = vpop.f32.mrb[0].mxu0
  %v579 = vadd.f32 %v83, %v578
  %v580 = vpop.f32.mrb[0].mxu0
  %v581 = vadd.f32 %v87, %v580
  %582 = vmatprep.mubr.bf16.mxu0 %v215
  %583 = vmatmul.mubr.bf16.gmra.mrb[0].mxu0 %v214
  %v584 = vpop.f32.mrb[0].mxu0
  %v585 = vadd.f32 %v83, %v584
  %v586 = vpop.f32.mrb[0].mxu0
  %v587 = vadd.f32 %v87, %v586
  %v588 = vpop.f32.mrb[0].mxu0
  %v589 = vadd.f32 %v83, %v588
  %v590 = vpop.f32.mrb[0].mxu0
  %v591 = vadd.f32 %v87, %v590
  %592 = vmatprep.mubr.bf16.mxu0 %v217
  %593 = vmatmul.mubr.bf16.gmra.mrb[0].mxu0 %v216
  %v594 = vpop.f32.mrb[0].mxu0
  %v595 = vadd.f32 %v83, %v594
  %v596 = vpop.f32.mrb[0].mxu0
  %v597 = vadd.f32 %v87, %v596
  %v598 = vpop.f32.mrb[0].mxu0
  %v599 = vadd.f32 %v83, %v598
  %v600 = vpop.f32.mrb[0].mxu0
  %v601 = vadd.f32 %v87, %v600
  %602 = vdwg.mxu0
  %v603 = vmax.f32 %v445, 0.0
  %v604 = vmax.f32 %v447, 0.0
  %v605 = vmax.f32 %v449, 0.0
  %v606 = vmax.f32 %v451, 0.0
  %v607 = vmax.f32 %v455, 0.0
  %v608 = vmax.f32 %v457, 0.0
  %v609 = vmax.f32 %v459, 0.0
  %v610 = vmax.f32 %v461, 0.0
  %v611 = vmax.f32 %v465, 0.0
  %v612 = vmax.f32 %v467, 0.0
  %v613 = vmax.f32 %v469, 0.0
  %v614 = vmax.f32 %v471, 0.0
  %v615 = vmax.f32 %v475, 0.0
  %v616 = vmax.f32 %v477, 0.0
  %v617 = vmax.f32 %v479, 0.0
  %v618 = vmax.f32 %v481, 0.0
  %v619 = vmax.f32 %v485, 0.0
  %v620 = vmax.f32 %v487, 0.0
  %v621 = vmax.f32 %v489, 0.0
  %v622 = vmax.f32 %v491, 0.0
  %v623 = vmax.f32 %v495, 0.0
  %v624 = vmax.f32 %v497, 0.0
  %v625 = vmax.f32 %v499, 0.0
  %v626 = vmax.f32 %v501, 0.0
  %v627 = vmax.f32 %v505, 0.0
  %v628 = vmax.f32 %v507, 0.0
  %v629 = vmax.f32 %v509, 0.0
  %v630 = vmax.f32 %v511, 0.0
  %v631 = vmax.f32 %v515, 0.0
  %v632 = vmax.f32 %v517, 0.0
  %v633 = vmax.f32 %v519, 0.0
  %v634 = vmax.f32 %v521, 0.0
  %v635 = vmax.f32 %v525, 0.0
  %v636 = vmax.f32 %v527, 0.0
  %v637 = vmax.f32 %v529, 0.0
  %v638 = vmax.f32 %v531, 0.0
  %v639 = vmax.f32 %v535, 0.0
  %v640 = vmax.f32 %v537, 0.0
  %v641 = vmax.f32 %v539, 0.0
  %v642 = vmax.f32 %v541, 0.0
  %v643 = vmax.f32 %v545, 0.0
  %v644 = vmax.f32 %v547, 0.0
  %v645 = vmax.f32 %v549, 0.0
  %v646 = vmax.f32 %v551, 0.0
  %v647 = vmax.f32 %v555, 0.0
  %v648 = vmax.f32 %v557, 0.0
  %v649 = vmax.f32 %v559, 0.0
  %v650 = vmax.f32 %v561, 0.0
  %v651 = vmax.f32 %v565, 0.0
  %v652 = vmax.f32 %v567, 0.0
  %v653 = vmax.f32 %v569, 0.0
  %v654 = vmax.f32 %v571, 0.0
  %v655 = vmax.f32 %v575, 0.0
  %v656 = vmax.f32 %v577, 0.0
  %v657 = vmax.f32 %v579, 0.0
  %v658 = vmax.f32 %v581, 0.0
  %v659 = vmax.f32 %v585, 0.0
  %v660 = vmax.f32 %v587, 0.0
  %v661 = vmax.f32 %v589, 0.0
  %v662 = vmax.f32 %v591, 0.0
  %v663 = vmax.f32 %v595, 0.0
  %v664 = vmax.f32 %v597, 0.0
  %v665 = vmax.f32 %v599, 0.0
  %v666 = vmax.f32 %v601, 0.0
  %v667 = vpack.c.bf16 %v605, %v603
  %v668 = vpack.c.bf16 %v606, %v604
  %v669 = vpack.c.bf16 %v609, %v607
  %v670 = vpack.c.bf16 %v610, %v608
  %v671 = vpack.c.bf16 %v613, %v611
  %v672 = vpack.c.bf16 %v614, %v612
  %v673 = vpack.c.bf16 %v617, %v615
  %v674 = vpack.c.bf16 %v618, %v616
  %v675 = vpack.c.bf16 %v621, %v619
  %v676 = vpack.c.bf16 %v622, %v620
  %v677 = vpack.c.bf16 %v625, %v623
  %v678 = vpack.c.bf16 %v626, %v624
  %v679 = vpack.c.bf16 %v629, %v627
  %v680 = vpack.c.bf16 %v630, %v628
  %v681 = vpack.c.bf16 %v633, %v631
  %v682 = vpack.c.bf16 %v634, %v632
  %v683 = vpack.c.bf16 %v637, %v635
  %v684 = vpack.c.bf16 %v638, %v636
  %v685 = vpack.c.bf16 %v641, %v639
  %v686 = vpack.c.bf16 %v642, %v640
  %v687 = vpack.c.bf16 %v645, %v643
  %v688 = vpack.c.bf16 %v646, %v644
  %v689 = vpack.c.bf16 %v649, %v647
  %v690 = vpack.c.bf16 %v650, %v648
  %v691 = vpack.c.bf16 %v653, %v651
  %v692 = vpack.c.bf16 %v654, %v652
  %v693 = vpack.c.bf16 %v657, %v655
  %v694 = vpack.c.bf16 %v658, %v656
  %v695 = vpack.c.bf16 %v661, %v659
  %v696 = vpack.c.bf16 %v662, %v660
  %v697 = vpack.c.bf16 %v665, %v663
  %v698 = vpack.c.bf16 %v666, %v664
  %v731 = vunpack.c.l.b16 %v667
  %v732 = vunpack.c.l.b16 %v668
  %v733 = vunpack.c.h.b16 %v667
  %v734 = vunpack.c.h.b16 %v668
  %v735 = vunpack.c.l.b16 %v669
  %v736 = vunpack.c.l.b16 %v670
  %v737 = vunpack.c.h.b16 %v669
  %v738 = vunpack.c.h.b16 %v670
  %v739 = vunpack.c.l.b16 %v671
  %v740 = vunpack.c.l.b16 %v672
  %v741 = vunpack.c.h.b16 %v671
  %v742 = vunpack.c.h.b16 %v672
  %v743 = vunpack.c.l.b16 %v673
  %v744 = vunpack.c.l.b16 %v674
  %v745 = vunpack.c.h.b16 %v673
  %v746 = vunpack.c.h.b16 %v674
  %v747 = vunpack.c.l.b16 %v675
  %v748 = vunpack.c.l.b16 %v676
  %v749 = vunpack.c.h.b16 %v675
  %v750 = vunpack.c.h.b16 %v676
  %v751 = vunpack.c.l.b16 %v677
  %v752 = vunpack.c.l.b16 %v678
  %v753 = vunpack.c.h.b16 %v677
  %v754 = vunpack.c.h.b16 %v678
  %v755 = vunpack.c.l.b16 %v679
  %v756 = vunpack.c.l.b16 %v680
  %v757 = vunpack.c.h.b16 %v679
  %v758 = vunpack.c.h.b16 %v680
  %v759 = vunpack.c.l.b16 %v681
  %v760 = vunpack.c.l.b16 %v682
  %v761 = vunpack.c.h.b16 %v681
  %v762 = vunpack.c.h.b16 %v682
  %v763 = vunpack.c.l.b16 %v683
  %v764 = vunpack.c.l.b16 %v684
  %v765 = vunpack.c.h.b16 %v683
  %v766 = vunpack.c.h.b16 %v684
  %v767 = vunpack.c.l.b16 %v685
  %v768 = vunpack.c.l.b16 %v686
  %v769 = vunpack.c.h.b16 %v685
  %v770 = vunpack.c.h.b16 %v686
  %v771 = vunpack.c.l.b16 %v687
  %v772 = vunpack.c.l.b16 %v688
  %v773 = vunpack.c.h.b16 %v687
  %v774 = vunpack.c.h.b16 %v688
  %v775 = vunpack.c.l.b16 %v689
  %v776 = vunpack.c.l.b16 %v690
  %v777 = vunpack.c.h.b16 %v689
  %v778 = vunpack.c.h.b16 %v690
  %v779 = vunpack.c.l.b16 %v691
  %v780 = vunpack.c.l.b16 %v692
  %v781 = vunpack.c.h.b16 %v691
  %v782 = vunpack.c.h.b16 %v692
  %v783 = vunpack.c.l.b16 %v693
  %v784 = vunpack.c.l.b16 %v694
  %v785 = vunpack.c.h.b16 %v693
  %v786 = vunpack.c.h.b16 %v694
  %v787 = vunpack.c.l.b16 %v695
  %v788 = vunpack.c.l.b16 %v696
  %v789 = vunpack.c.h.b16 %v695
  %v790 = vunpack.c.h.b16 %v696
  %v791 = vunpack.c.l.b16 %v697
  %v792 = vunpack.c.l.b16 %v698
  %v793 = vunpack.c.h.b16 %v697
  %v794 = vunpack.c.h.b16 %v698
  %v795 = vpack.c.b16 %v732, %v731
  %v796 = vpack.c.b16 %v734, %v733
  %v797 = vpack.c.b16 %v736, %v735
  %v798 = vpack.c.b16 %v738, %v737
  %v799 = vpack.c.b16 %v740, %v739
  %v800 = vpack.c.b16 %v742, %v741
  %v801 = vpack.c.b16 %v744, %v743
  %v802 = vpack.c.b16 %v746, %v745
  %v803 = vpack.c.b16 %v748, %v747
  %v804 = vpack.c.b16 %v750, %v749
  %v805 = vpack.c.b16 %v752, %v751
  %v806 = vpack.c.b16 %v754, %v753
  %v807 = vpack.c.b16 %v756, %v755
  %v808 = vpack.c.b16 %v758, %v757
  %v809 = vpack.c.b16 %v760, %v759
  %v810 = vpack.c.b16 %v762, %v761
  %v811 = vpack.c.b16 %v764, %v763
  %v812 = vpack.c.b16 %v766, %v765
  %v813 = vpack.c.b16 %v768, %v767
  %v814 = vpack.c.b16 %v770, %v769
  %v815 = vpack.c.b16 %v772, %v771
  %v816 = vpack.c.b16 %v774, %v773
  %v817 = vpack.c.b16 %v776, %v775
  %v818 = vpack.c.b16 %v778, %v777
  %v819 = vpack.c.b16 %v780, %v779
  %v820 = vpack.c.b16 %v782, %v781
  %v821 = vpack.c.b16 %v784, %v783
  %v822 = vpack.c.b16 %v786, %v785
  %v823 = vpack.c.b16 %v788, %v787
  %v824 = vpack.c.b16 %v790, %v789
  %v825 = vpack.c.b16 %v792, %v791
  %v826 = vpack.c.b16 %v794, %v793
  %859 = vst [vmem:[%s3] sm:$0xff] %v795
  %860 = vst [vmem:[%s3 + $0x8] sm:$0xff] %v796
  %861 = vst [vmem:[%s3 + $0x10] sm:$0xff] %v797
  %862 = vst [vmem:[%s3 + $0x18] sm:$0xff] %v798
  %863 = vst [vmem:[%s3 + $0x20] sm:$0xff] %v799
  %864 = vst [vmem:[%s3 + $0x28] sm:$0xff] %v800
  %865 = vst [vmem:[%s3 + $0x30] sm:$0xff] %v801
  %866 = vst [vmem:[%s3 + $0x38] sm:$0xff] %v802
  %867 = vst [vmem:[%s3 + $0x40] sm:$0xff] %v803
  %868 = vst [vmem:[%s3 + $0x48] sm:$0xff] %v804
  %869 = vst [vmem:[%s3 + $0x50] sm:$0xff] %v805
  %870 = vst [vmem:[%s3 + $0x58] sm:$0xff] %v806
  %871 = vst [vmem:[%s3 + $0x60] sm:$0xff] %v807
  %872 = vst [vmem:[%s3 + $0x68] sm:$0xff] %v808
  %873 = vst [vmem:[%s3 + $0x70] sm:$0xff] %v809
  %874 = vst [vmem:[%s3 + $0x78] sm:$0xff] %v810
  %875 = vst [vmem:[%s3 + $0x80] sm:$0xff] %v811
  %876 = vst [vmem:[%s3 + $0x88] sm:$0xff] %v812
  %877 = vst [vmem:[%s3 + $0x90] sm:$0xff] %v813
  %878 = vst [vmem:[%s3 + $0x98] sm:$0xff] %v814
  %879 = vst [vmem:[%s3 + $0xa0] sm:$0xff] %v815
  %880 = vst [vmem:[%s3 + $0xa8] sm:$0xff] %v816
  %881 = vst [vmem:[%s3 + $0xb0] sm:$0xff] %v817
  %882 = vst [vmem:[%s3 + $0xb8] sm:$0xff] %v818
  %883 = vst [vmem:[%s3 + $0xc0] sm:$0xff] %v819
  %884 = vst [vmem:[%s3 + $0xc8] sm:$0xff] %v820
  %885 = vst [vmem:[%s3 + $0xd0] sm:$0xff] %v821
  %886 = vst [vmem:[%s3 + $0xd8] sm:$0xff] %v822
  %887 = vst [vmem:[%s3 + $0xe0] sm:$0xff] %v823
  %888 = vst [vmem:[%s3 + $0xe8] sm:$0xff] %v824
  %889 = vst [vmem:[%s3 + $0xf0] sm:$0xff] %v825
  %890 = vst [vmem:[%s3 + $0xf8] sm:$0xff] %v826
  // Predicated region
  $region14: #{forward.5} parent=0 // pred_check
    _
  $region15: #{forward.5} parent=0 // pred_check_branch
    %892 = sbr.rel (0) target = $region17
  $region16: #{forward.5} parent=0 // pred_region
    _
  $region17: #{forward.5} parent=0 // pred_fallthru
    _
  // Predicated region
  $region18: #{forward.5} parent=0 // pred_check
    _
  $region19: #{forward.5} parent=0 // pred_check_branch
    %894 = sbr.rel (0) target = $region21
  $region20: #{forward.5} parent=0 // pred_region
    _
  $region21: #{forward.5} parent=0 // pred_fallthru
    _

// kernel: forward.7
$region0: #{forward.7}
  #allocation0 [shape = 'u32[]', space=smem, size = 0x4, offset = 0x4, fixed_abs, tag = 'smem constant byte address 0x4 - core index']
  #allocation1 [shape = 'u32[144,128]{1,0:T(1,128)}', space=vmem, size = 0x12000, scoped, tag = 'internal scratch']
  %s0 = inlined_call_operand.vmem [shape: bf16[256,256], index: 0, kind: input, shape index: {}]
  %s1 = inlined_call_operand.vmem [shape: bf16[256,128], index: 1, kind: input, shape index: {}]
  %s2 = inlined_call_operand.vmem [shape: f32[1,128], index: 2, kind: input, shape index: {}]
  %s3 = inlined_call_operand.vmem [shape: f32[256,128], index: 3, kind: output, shape index: {}]
  %s4 = sld [smem:[#allocation0]]
  $region22: #{forward.7} parent=0
    _
  %s6 = ssub.s32 1, %s4
  %s7 = scalar_select 0, %s6, %s4
  // Predicated region
  $region2: #{forward.7} parent=0 // pred_check
    _
  $region3: #{forward.7} parent=0 // pred_check_branch
    %9 = sbr.rel (0) target = $region5
  $region4: #{forward.7} parent=0 // pred_region
    _
  $region5: #{forward.7} parent=0 // pred_fallthru
    _
  // Predicated region
  $region6: #{forward.7} parent=0 // pred_check
    _
  $region7: #{forward.7} parent=0 // pred_check_branch
    %11 = sbr.rel (0) target = $region9
  $region8: #{forward.7} parent=0 // pred_region
    _
  $region9: #{forward.7} parent=0 // pred_fallthru
    _
  // Predicated region
  $region10: #{forward.7} parent=0 // pred_check
    _
  $region11: #{forward.7} parent=0 // pred_check_branch
    %13 = sbr.rel (0) target = $region13
  $region12: #{forward.7} parent=0 // pred_region
    _
  $region13: #{forward.7} parent=0 // pred_fallthru
    _
  %v15 = vld [vmem:[%s0] sm:$0xff]
  %v16 = vld [vmem:[%s0 + $0x8] sm:$0xff]
  %v17 = vld [vmem:[%s0 + $0x10] sm:$0xff]
  %v18 = vld [vmem:[%s0 + $0x18] sm:$0xff]
  %v19 = vld [vmem:[%s0 + $0x20] sm:$0xff]
  %v20 = vld [vmem:[%s0 + $0x28] sm:$0xff]
  %v21 = vld [vmem:[%s0 + $0x30] sm:$0xff]
  %v22 = vld [vmem:[%s0 + $0x38] sm:$0xff]
  %v23 = vld [vmem:[%s0 + $0x40] sm:$0xff]
  %v24 = vld [vmem:[%s0 + $0x48] sm:$0xff]
  %v25 = vld [vmem:[%s0 + $0x50] sm:$0xff]
  %v26 = vld [vmem:[%s0 + $0x58] sm:$0xff]
  %v27 = vld [vmem:[%s0 + $0x60] sm:$0xff]
  %v28 = vld [vmem:[%s0 + $0x68] sm:$0xff]
  %v29 = vld [vmem:[%s0 + $0x70] sm:$0xff]
  %v30 = vld [vmem:[%s0 + $0x78] sm:$0xff]
  %v31 = vld [vmem:[%s0 + $0x80] sm:$0xff]
  %v32 = vld [vmem:[%s0 + $0x88] sm:$0xff]
  %v33 = vld [vmem:[%s0 + $0x90] sm:$0xff]
  %v34 = vld [vmem:[%s0 + $0x98] sm:$0xff]
  %v35 = vld [vmem:[%s0 + $0xa0] sm:$0xff]
  %v36 = vld [vmem:[%s0 + $0xa8] sm:$0xff]
  %v37 = vld [vmem:[%s0 + $0xb0] sm:$0xff]
  %v38 = vld [vmem:[%s0 + $0xb8] sm:$0xff]
  %v39 = vld [vmem:[%s0 + $0xc0] sm:$0xff]
  %v40 = vld [vmem:[%s0 + $0xc8] sm:$0xff]
  %v41 = vld [vmem:[%s0 + $0xd0] sm:$0xff]
  %v42 = vld [vmem:[%s0 + $0xd8] sm:$0xff]
  %v43 = vld [vmem:[%s0 + $0xe0] sm:$0xff]
  %v44 = vld [vmem:[%s0 + $0xe8] sm:$0xff]
  %v45 = vld [vmem:[%s0 + $0xf0] sm:$0xff]
  %v46 = vld [vmem:[%s0 + $0xf8] sm:$0xff]
  %v47 = vld [vmem:[%s1] sm:$0xf]
  %v48 = vld [vmem:[%s1 + $0x4] sm:$0xf]
  %v49 = vld [vmem:[%s1 + $0x8] sm:$0xf]
  %v50 = vld [vmem:[%s1 + $0xc] sm:$0xf]
  %v51 = vld [vmem:[%s1 + $0x10] sm:$0xf]
  %v52 = vld [vmem:[%s1 + $0x14] sm:$0xf]
  %v53 = vld [vmem:[%s1 + $0x18] sm:$0xf]
  %v54 = vld [vmem:[%s1 + $0x1c] sm:$0xf]
  %v55 = vld [vmem:[%s1 + $0x20] sm:$0xf]
  %v56 = vld [vmem:[%s1 + $0x24] sm:$0xf]
  %v57 = vld [vmem:[%s1 + $0x28] sm:$0xf]
  %v58 = vld [vmem:[%s1 + $0x2c] sm:$0xf]
  %v59 = vld [vmem:[%s1 + $0x30] sm:$0xf]
  %v60 = vld [vmem:[%s1 + $0x34] sm:$0xf]
  %v61 = vld [vmem:[%s1 + $0x38] sm:$0xf]
  %v62 = vld [vmem:[%s1 + $0x3c] sm:$0xf]
  %v63 = vld [vmem:[%s1 + $0x40] sm:$0xf]
  %v64 = vld [vmem:[%s1 + $0x44] sm:$0xf]
  %v65 = vld [vmem:[%s1 + $0x48] sm:$0xf]
  %v66 = vld [vmem:[%s1 + $0x4c] sm:$0xf]
  %v67 = vld [vmem:[%s1 + $0x50] sm:$0xf]
  %v68 = vld [vmem:[%s1 + $0x54] sm:$0xf]
  %v69 = vld [vmem:[%s1 + $0x58] sm:$0xf]
  %v70 = vld [vmem:[%s1 + $0x5c] sm:$0xf]
  %v71 = vld [vmem:[%s1 + $0x60] sm:$0xf]
  %v72 = vld [vmem:[%s1 + $0x64] sm:$0xf]
  %v73 = vld [vmem:[%s1 + $0x68] sm:$0xf]
  %v74 = vld [vmem:[%s1 + $0x6c] sm:$0xf]
  %v75 = vld [vmem:[%s1 + $0x70] sm:$0xf]
  %v76 = vld [vmem:[%s1 + $0x74] sm:$0xf]
  %v77 = vld [vmem:[%s1 + $0x78] sm:$0xf]
  %v78 = vld [vmem:[%s1 + $0x7c] sm:$0xf]
  %v79 = vld [vmem:[%s2] sm:$0x1]
  %v81 = vlaneseq
  %v82 = vshrl.u32 %v81, 7
  %v83 = vsub.s32 0, %v82
  %v84 = vrot.slane %v79, %v83
  %v118 = vunpack.c.l.b16 %v15
  %v119 = vunpack.c.h.b16 %v15
  %v120 = vunpack.c.l.b16 %v16
  %v121 = vunpack.c.h.b16 %v16
  %v122 = vunpack.c.l.b16 %v17
  %v123 = vunpack.c.h.b16 %v17
  %v124 = vunpack.c.l.b16 %v18
  %v125 = vunpack.c.h.b16 %v18
  %v126 = vunpack.c.l.b16 %v19
  %v127 = vunpack.c.h.b16 %v19
  %v128 = vunpack.c.l.b16 %v20
  %v129 = vunpack.c.h.b16 %v20
  %v130 = vunpack.c.l.b16 %v21
  %v131 = vunpack.c.h.b16 %v21
  %v132 = vunpack.c.l.b16 %v22
  %v133 = vunpack.c.h.b16 %v22
  %v134 = vunpack.c.l.b16 %v23
  %v135 = vunpack.c.h.b16 %v23
  %v136 = vunpack.c.l.b16 %v24
  %v137 = vunpack.c.h.b16 %v24
  %v138 = vunpack.c.l.b16 %v25
  %v139 = vunpack.c.h.b16 %v25
  %v140 = vunpack.c.l.b16 %v26
  %v141 = vunpack.c.h.b16 %v26
  %v142 = vunpack.c.l.b16 %v27
  %v143 = vunpack.c.h.b16 %v27
  %v144 = vunpack.c.l.b16 %v28
  %v145 = vunpack.c.h.b16 %v28
  %v146 = vunpack.c.l.b16 %v29
  %v147 = vunpack.c.h.b16 %v29
  %v148 = vunpack.c.l.b16 %v30
  %v149 = vunpack.c.h.b16 %v30
  %v150 = vunpack.c.l.b16 %v31
  %v151 = vunpack.c.h.b16 %v31
  %v152 = vunpack.c.l.b16 %v32
  %v153 = vunpack.c.h.b16 %v32
  %v154 = vunpack.c.l.b16 %v33
  %v155 = vunpack.c.h.b16 %v33
  %v156 = vunpack.c.l.b16 %v34
  %v157 = vunpack.c.h.b16 %v34
  %v158 = vunpack.c.l.b16 %v35
  %v159 = vunpack.c.h.b16 %v35
  %v160 = vunpack.c.l.b16 %v36
  %v161 = vunpack.c.h.b16 %v36
  %v162 = vunpack.c.l.b16 %v37
  %v163 = vunpack.c.h.b16 %v37
  %v164 = vunpack.c.l.b16 %v38
  %v165 = vunpack.c.h.b16 %v38
  %v166 = vunpack.c.l.b16 %v39
  %v167 = vunpack.c.h.b16 %v39
  %v168 = vunpack.c.l.b16 %v40
  %v169 = vunpack.c.h.b16 %v40
  %v170 = vunpack.c.l.b16 %v41
  %v171 = vunpack.c.h.b16 %v41
  %v172 = vunpack.c.l.b16 %v42
  %v173 = vunpack.c.h.b16 %v42
  %v174 = vunpack.c.l.b16 %v43
  %v175 = vunpack.c.h.b16 %v43
  %v176 = vunpack.c.l.b16 %v44
  %v177 = vunpack.c.h.b16 %v44
  %v178 = vunpack.c.l.b16 %v45
  %v179 = vunpack.c.h.b16 %v45
  %v180 = vunpack.c.l.b16 %v46
  %v181 = vunpack.c.h.b16 %v46
  %v182 = vpack.c.b16 %v120, %v118
  %v183 = vpack.c.b16 %v121, %v119
  %v184 = vpack.c.b16 %v124, %v122
  %v185 = vpack.c.b16 %v125, %v123
  %v186 = vpack.c.b16 %v128, %v126
  %v187 = vpack.c.b16 %v129, %v127
  %v188 = vpack.c.b16 %v132, %v130
  %v189 = vpack.c.b16 %v133, %v131
  %v190 = vpack.c.b16 %v136, %v134
  %v191 = vpack.c.b16 %v137, %v135
  %v192 = vpack.c.b16 %v140, %v138
  %v193 = vpack.c.b16 %v141, %v139
  %v194 = vpack.c.b16 %v144, %v142
  %v195 = vpack.c.b16 %v145, %v143
  %v196 = vpack.c.b16 %v148, %v146
  %v197 = vpack.c.b16 %v149, %v147
  %v198 = vpack.c.b16 %v152, %v150
  %v199 = vpack.c.b16 %v153, %v151
  %v200 = vpack.c.b16 %v156, %v154
  %v201 = vpack.c.b16 %v157, %v155
  %v202 = vpack.c.b16 %v160, %v158
  %v203 = vpack.c.b16 %v161, %v159
  %v204 = vpack.c.b16 %v164, %v162
  %v205 = vpack.c.b16 %v165, %v163
  %v206 = vpack.c.b16 %v168, %v166
  %v207 = vpack.c.b16 %v169, %v167
  %v208 = vpack.c.b16 %v172, %v170
  %v209 = vpack.c.b16 %v173, %v171
  %v210 = vpack.c.b16 %v176, %v174
  %v211 = vpack.c.b16 %v177, %v175
  %v212 = vpack.c.b16 %v180, %v178
  %v213 = vpack.c.b16 %v181, %v179
  %v278 = vunpack.c.l.b16 %v47
  %v279 = vunpack.c.l.b16 %v48
  %v280 = vunpack.c.l.b16 %v49
  %v281 = vunpack.c.l.b16 %v50
  %v282 = vunpack.c.l.b16 %v51
  %v283 = vunpack.c.l.b16 %v52
  %v284 = vunpack.c.l.b16 %v53
  %v285 = vunpack.c.l.b16 %v54
  %v286 = vunpack.c.l.b16 %v55
  %v287 = vunpack.c.l.b16 %v56
  %v288 = vunpack.c.l.b16 %v57
  %v289 = vunpack.c.l.b16 %v58
  %v290 = vunpack.c.l.b16 %v59
  %v291 = vunpack.c.l.b16 %v60
  %v292 = vunpack.c.l.b16 %v61
  %v293 = vunpack.c.l.b16 %v62
  %v294 = vunpack.c.l.b16 %v63
  %v295 = vunpack.c.l.b16 %v64
  %v296 = vunpack.c.l.b16 %v65
  %v297 = vunpack.c.l.b16 %v66
  %v298 = vunpack.c.l.b16 %v67
  %v299 = vunpack.c.l.b16 %v68
  %v300 = vunpack.c.l.b16 %v69
  %v301 = vunpack.c.l.b16 %v70
  %v302 = vunpack.c.l.b16 %v71
  %v303 = vunpack.c.l.b16 %v72
  %v304 = vunpack.c.l.b16 %v73
  %v305 = vunpack.c.l.b16 %v74
  %v306 = vunpack.c.l.b16 %v75
  %v307 = vunpack.c.l.b16 %v76
  %v308 = vunpack.c.l.b16 %v77
  %v309 = vunpack.c.l.b16 %v78
  %v310 = vpack.c.b16 %v279, %v278
  %v311 = vpack.c.b16 %v281, %v280
  %v312 = vpack.c.b16 %v283, %v282
  %v313 = vpack.c.b16 %v285, %v284
  %v314 = vpack.c.b16 %v287, %v286
  %v315 = vpack.c.b16 %v289, %v288
  %v316 = vpack.c.b16 %v291, %v290
  %v317 = vpack.c.b16 %v293, %v292
  %v318 = vpack.c.b16 %v295, %v294
  %v319 = vpack.c.b16 %v297, %v296
  %v320 = vpack.c.b16 %v299, %v298
  %v321 = vpack.c.b16 %v301, %v300
  %v322 = vpack.c.b16 %v303, %v302
  %v323 = vpack.c.b16 %v305, %v304
  %v324 = vpack.c.b16 %v307, %v306
  %v325 = vpack.c.b16 %v309, %v308
  %342 = vmatprep.subr.bf16.mxu0 0
  %343 = vmatpush1.bf16.msra.mxu0 %v310
  %344 = vmatprep.subr.bf16.mxu0 0
  %345 = vmatpush1.bf16.msra.mxu0 %v311
  %346 = vmatprep.subr.bf16.mxu0 0
  %347 = vmatpush1.bf16.msra.mxu0 %v312
  %348 = vmatprep.subr.bf16.mxu0 0
  %349 = vmatpush1.bf16.msra.mxu0 %v313
  %350 = vmatprep.subr.bf16.mxu0 0
  %351 = vmatpush1.bf16.msra.mxu0 %v314
  %352 = vmatprep.subr.bf16.mxu0 0
  %353 = vmatpush1.bf16.msra.mxu0 %v315
  %354 = vmatprep.subr.bf16.mxu0 0
  %355 = vmatpush1.bf16.msra.mxu0 %v316
  %356 = vmatprep.subr.bf16.mxu0 0
  %357 = vmatpush1.bf16.msra.mxu0 %v317
  %358 = vmatprep.subr.bf16.mxu0 0
  %359 = vmatpush1.bf16.msra.mxu0 %v318
  %360 = vmatprep.subr.bf16.mxu0 0
  %361 = vmatpush1.bf16.msra.mxu0 %v319
  %362 = vmatprep.subr.bf16.mxu0 0
  %363 = vmatpush1.bf16.msra.mxu0 %v320
  %364 = vmatprep.subr.bf16.mxu0 0
  %365 = vmatpush1.bf16.msra.mxu0 %v321
  %366 = vmatprep.subr.bf16.mxu0 0
  %367 = vmatpush1.bf16.msra.mxu0 %v322
  %368 = vmatprep.subr.bf16.mxu0 0
  %369 = vmatpush1.bf16.msra.mxu0 %v323
  %370 = vmatprep.subr.bf16.mxu0 0
  %371 = vmatpush1.bf16.msra.mxu0 %v324
  %372 = vmatprep.subr.bf16.mxu0 0
  %373 = vmatpush1.bf16.msra.mxu0 %v325
  %374 = vmatprep.mubr.bf16.mxu0 %v183
  %375 = vmatmul.mubr.bf16.gmra.mrb[0].mxu0 %v182
  %v376 = vpop.f32.mrb[0].mxu0
  %v377 = vadd.f32 %v84, %v376
  %v378 = vpop.f32.mrb[0].mxu0
  %v379 = vpop.f32.mrb[0].mxu0
  %v380 = vadd.f32 %v84, %v379
  %v381 = vpop.f32.mrb[0].mxu0
  %382 = vmatprep.mubr.bf16.mxu0 %v185
  %383 = vmatmul.mubr.bf16.gmra.mrb[0].mxu0 %v184
  %v384 = vpop.f32.mrb[0].mxu0
  %v385 = vadd.f32 %v84, %v384
  %v386 = vpop.f32.mrb[0].mxu0
  %v387 = vpop.f32.mrb[0].mxu0
  %v388 = vadd.f32 %v84, %v387
  %v389 = vpop.f32.mrb[0].mxu0
  %390 = vmatprep.mubr.bf16.mxu0 %v187
  %391 = vmatmul.mubr.bf16.gmra.mrb[0].mxu0 %v186
  %v392 = vpop.f32.mrb[0].mxu0
  %v393 = vadd.f32 %v84, %v392
  %v394 = vpop.f32.mrb[0].mxu0
  %v395 = vpop.f32.mrb[0].mxu0
  %v396 = vadd.f32 %v84, %v395
  %v397 = vpop.f32.mrb[0].mxu0
  %398 = vmatprep.mubr.bf16.mxu0 %v189
  %399 = vmatmul.mubr.bf16.gmra.mrb[0].mxu0 %v188
  %v400 = vpop.f32.mrb[0].mxu0
  %v401 = vadd.f32 %v84, %v400
  %v402 = vpop.f32.mrb[0].mxu0
  %v403 = vpop.f32.mrb[0].mxu0
  %v404 = vadd.f32 %v84, %v403
  %v405 = vpop.f32.mrb[0].mxu0
  %406 = vmatprep.mubr.bf16.mxu0 %v191
  %407 = vmatmul.mubr.bf16.gmra.mrb[0].mxu0 %v190
  %v408 = vpop.f32.mrb[0].mxu0
  %v409 = vadd.f32 %v84, %v408
  %v410 = vpop.f32.mrb[0].mxu0
  %v411 = vpop.f32.mrb[0].mxu0
  %v412 = vadd.f32 %v84, %v411
  %v413 = vpop.f32.mrb[0].mxu0
  %414 = vmatprep.mubr.bf16.mxu0 %v193
  %415 = vmatmul.mubr.bf16.gmra.mrb[0].mxu0 %v192
  %v416 = vpop.f32.mrb[0].mxu0
  %v417 = vadd.f32 %v84, %v416
  %v418 = vpop.f32.mrb[0].mxu0
  %v419 = vpop.f32.mrb[0].mxu0
  %v420 = vadd.f32 %v84, %v419
  %v421 = vpop.f32.mrb[0].mxu0
  %422 = vmatprep.mubr.bf16.mxu0 %v195
  %423 = vmatmul.mubr.bf16.gmra.mrb[0].mxu0 %v194
  %v424 = vpop.f32.mrb[0].mxu0
  %v425 = vadd.f32 %v84, %v424
  %v426 = vpop.f32.mrb[0].mxu0
  %v427 = vpop.f32.mrb[0].mxu0
  %v428 = vadd.f32 %v84, %v427
  %v429 = vpop.f32.mrb[0].mxu0
  %430 = vmatprep.mubr.bf16.mxu0 %v197
  %431 = vmatmul.mubr.bf16.gmra.mrb[0].mxu0 %v196
  %v432 = vpop.f32.mrb[0].mxu0
  %v433 = vadd.f32 %v84, %v432
  %v434 = vpop.f32.mrb[0].mxu0
  %v435 = vpop.f32.mrb[0].mxu0
  %v436 = vadd.f32 %v84, %v435
  %v437 = vpop.f32.mrb[0].mxu0
  %438 = vmatprep.mubr.bf16.mxu0 %v199
  %439 = vmatmul.mubr.bf16.gmra.mrb[0].mxu0 %v198
  %v440 = vpop.f32.mrb[0].mxu0
  %v441 = vadd.f32 %v84, %v440
  %v442 = vpop.f32.mrb[0].mxu0
  %v443 = vpop.f32.mrb[0].mxu0
  %v444 = vadd.f32 %v84, %v443
  %v445 = vpop.f32.mrb[0].mxu0
  %446 = vmatprep.mubr.bf16.mxu0 %v201
  %447 = vmatmul.mubr.bf16.gmra.mrb[0].mxu0 %v200
  %v448 = vpop.f32.mrb[0].mxu0
  %v449 = vadd.f32 %v84, %v448
  %v450 = vpop.f32.mrb[0].mxu0
  %v451 = vpop.f32.mrb[0].mxu0
  %v452 = vadd.f32 %v84, %v451
  %v453 = vpop.f32.mrb[0].mxu0
  %454 = vmatprep.mubr.bf16.mxu0 %v203
  %455 = vmatmul.mubr.bf16.gmra.mrb[0].mxu0 %v202
  %v456 = vpop.f32.mrb[0].mxu0
  %v457 = vadd.f32 %v84, %v456
  %v458 = vpop.f32.mrb[0].mxu0
  %v459 = vpop.f32.mrb[0].mxu0
  %v460 = vadd.f32 %v84, %v459
  %v461 = vpop.f32.mrb[0].mxu0
  %462 = vmatprep.mubr.bf16.mxu0 %v205
  %463 = vmatmul.mubr.bf16.gmra.mrb[0].mxu0 %v204
  %v464 = vpop.f32.mrb[0].mxu0
  %v465 = vadd.f32 %v84, %v464
  %v466 = vpop.f32.mrb[0].mxu0
  %v467 = vpop.f32.mrb[0].mxu0
  %v468 = vadd.f32 %v84, %v467
  %v469 = vpop.f32.mrb[0].mxu0
  %470 = vmatprep.mubr.bf16.mxu0 %v207
  %471 = vmatmul.mubr.bf16.gmra.mrb[0].mxu0 %v206
  %v472 = vpop.f32.mrb[0].mxu0
  %v473 = vadd.f32 %v84, %v472
  %v474 = vpop.f32.mrb[0].mxu0
  %v475 = vpop.f32.mrb[0].mxu0
  %v476 = vadd.f32 %v84, %v475
  %v477 = vpop.f32.mrb[0].mxu0
  %478 = vmatprep.mubr.bf16.mxu0 %v209
  %479 = vmatmul.mubr.bf16.gmra.mrb[0].mxu0 %v208
  %v480 = vpop.f32.mrb[0].mxu0
  %v481 = vadd.f32 %v84, %v480
  %v482 = vpop.f32.mrb[0].mxu0
  %v483 = vpop.f32.mrb[0].mxu0
  %v484 = vadd.f32 %v84, %v483
  %v485 = vpop.f32.mrb[0].mxu0
  %486 = vmatprep.mubr.bf16.mxu0 %v211
  %487 = vmatmul.mubr.bf16.gmra.mrb[0].mxu0 %v210
  %v488 = vpop.f32.mrb[0].mxu0
  %v489 = vadd.f32 %v84, %v488
  %v490 = vpop.f32.mrb[0].mxu0
  %v491 = vpop.f32.mrb[0].mxu0
  %v492 = vadd.f32 %v84, %v491
  %v493 = vpop.f32.mrb[0].mxu0
  %494 = vmatprep.mubr.bf16.mxu0 %v213
  %495 = vmatmul.mubr.bf16.gmra.mrb[0].mxu0 %v212
  %v496 = vpop.f32.mrb[0].mxu0
  %v497 = vadd.f32 %v84, %v496
  %v498 = vpop.f32.mrb[0].mxu0
  %v499 = vpop.f32.mrb[0].mxu0
  %v500 = vadd.f32 %v84, %v499
  %v501 = vpop.f32.mrb[0].mxu0
  %502 = vdwg.mxu0
  %503 = vst [vmem:[%s3] sm:$0xff] %v377
  %504 = vst [vmem:[%s3 + $0x8] sm:$0xff] %v380
  %505 = vst [vmem:[%s3 + $0x10] sm:$0xff] %v385
  %506 = vst [vmem:[%s3 + $0x18] sm:$0xff] %v388
  %507 = vst [vmem:[%s3 + $0x20] sm:$0xff] %v393
  %508 = vst [vmem:[%s3 + $0x28] sm:$0xff] %v396
  %509 = vst [vmem:[%s3 + $0x30] sm:$0xff] %v401
  %510 = vst [vmem:[%s3 + $0x38] sm:$0xff] %v404
  %511 = vst [vmem:[%s3 + $0x40] sm:$0xff] %v409
  %512 = vst [vmem:[%s3 + $0x48] sm:$0xff] %v412
  %513 = vst [vmem:[%s3 + $0x50] sm:$0xff] %v417
  %514 = vst [vmem:[%s3 + $0x58] sm:$0xff] %v420
  %515 = vst [vmem:[%s3 + $0x60] sm:$0xff] %v425
  %516 = vst [vmem:[%s3 + $0x68] sm:$0xff] %v428
  %517 = vst [vmem:[%s3 + $0x70] sm:$0xff] %v433
  %518 = vst [vmem:[%s3 + $0x78] sm:$0xff] %v436
  %519 = vst [vmem:[%s3 + $0x80] sm:$0xff] %v441
  %520 = vst [vmem:[%s3 + $0x88] sm:$0xff] %v444
  %521 = vst [vmem:[%s3 + $0x90] sm:$0xff] %v449
  %522 = vst [vmem:[%s3 + $0x98] sm:$0xff] %v452
  %523 = vst [vmem:[%s3 + $0xa0] sm:$0xff] %v457
  %524 = vst [vmem:[%s3 + $0xa8] sm:$0xff] %v460
  %525 = vst [vmem:[%s3 + $0xb0] sm:$0xff] %v465
  %526 = vst [vmem:[%s3 + $0xb8] sm:$0xff] %v468
  %527 = vst [vmem:[%s3 + $0xc0] sm:$0xff] %v473
  %528 = vst [vmem:[%s3 + $0xc8] sm:$0xff] %v476
  %529 = vst [vmem:[%s3 + $0xd0] sm:$0xff] %v481
  %530 = vst [vmem:[%s3 + $0xd8] sm:$0xff] %v484
  %531 = vst [vmem:[%s3 + $0xe0] sm:$0xff] %v489
  %532 = vst [vmem:[%s3 + $0xe8] sm:$0xff] %v492
  %533 = vst [vmem:[%s3 + $0xf0] sm:$0xff] %v497
  %534 = vst [vmem:[%s3 + $0xf8] sm:$0xff] %v500
  // Predicated region
  $region14: #{forward.7} parent=0 // pred_check
    _
  $region15: #{forward.7} parent=0 // pred_check_branch
    %536 = sbr.rel (0) target = $region17
  $region16: #{forward.7} parent=0 // pred_region
    _
  $region17: #{forward.7} parent=0 // pred_fallthru
    _
  // Predicated region
  $region18: #{forward.7} parent=0 // pred_check
    _
  $region19: #{forward.7} parent=0 // pred_check_branch
    %538 = sbr.rel (0) target = $region21
  $region20: #{forward.7} parent=0 // pred_region
    _
  $region21: #{forward.7} parent=0 // pred_fallthru
    _

</llo_original>
